<compile_context>
chip_gen: v7x
topology: tpu7x:2x2x1
jax: 0.10.0
libtpu: 0.0.40
codegen_flags: <defaults>
</compile_context>

<pallas_src>
import jax
import jax.numpy as jnp
from jax.experimental import pallas as pl
from jax.experimental.pallas import tpu as pltpu  # noqa: F401  (kept for parity)

# ----------------------------- config (small) -------------------------------
B = 2          # batch
S = 8          # sequence length
HID = 32       # hidden size
NH = 2         # attention heads
DH = HID // NH # head dim
FF = 64        # intermediate (MLP) size
VOCAB = 128    # word vocab
TYPES = 8      # token-type vocab
MAXPOS = 16    # max position embeddings
NLABELS = 2    # classification labels
NLAYERS = 2    # encoder layers
LN_EPS = 1e-12
M = B * S      # tokens

EMB_ROWS = VOCAB + TYPES + S   # fused word + type + position table rows

# packed small-params buffer layout (one f32 [SM_ROWS, SM_W] DMA)
SM_W = 3 * HID                 # 96 lanes (max row width: fused qkv bias)
ROWS_PER_LAYER = 8             # bqkv, bo, ln1_g, ln1_b, b1, b2, ln2_g, ln2_b
ROW_EMB_G, ROW_EMB_B = 0, 1
ROW_LAYER0 = 2
ROW_BP = ROW_LAYER0 + ROWS_PER_LAYER * NLAYERS
ROW_BC = ROW_BP + 1
SM_ROWS = ROW_BC + 1


# ------------------------- single fused Pallas kernel ------------------------
def _bert_fwd_kernel(ids_ref, maskb_ref, emb_ref,
                     wqkv_ref, wo_ref, w1_ref, w2_ref, wpc_ref, sm_ref,
                     loss_ref, pred_ref):

    def mm(a, w_bf16):
        # MXU in bf16 (weights already bf16), accumulate in f32.
        return jnp.dot(a.astype(jnp.bfloat16), w_bf16,
                       preferred_element_type=jnp.float32)

    def layernorm(x, g, b):
        mu = jnp.mean(x, axis=-1, keepdims=True)
        var = jnp.mean((x - mu) ** 2, axis=-1, keepdims=True)
        return (x - mu) * jax.lax.rsqrt(var + LN_EPS) * g + b

    def srow(r, n):                      # static row slice of packed f32 params
        return sm_ref[r:r + 1, 0:n]      # [1, n] f32

    # ---- fused embedding lookup: word + token-type + position in ONE matmul ----
    ids = ids_ref[...]                   # [M, 4] int32 (word, type+V, pos+V+T, label)
    wid = ids[:, 0:1]
    tid = ids[:, 1:2]
    pid = ids[:, 2:3]
    iota = jax.lax.broadcasted_iota(jnp.int32, (M, EMB_ROWS), 1)
    onehot = ((iota == wid) | (iota == tid) | (iota == pid)).astype(jnp.bfloat16)
    x = jnp.dot(onehot, emb_ref[...], preferred_element_type=jnp.float32)  # [M, HID]
    x = layernorm(x, srow(ROW_EMB_G, HID), srow(ROW_EMB_B, HID))

    maskb = maskb_ref[...]               # [NH, M, M] additive bias (pad + cross-batch)

    # ---- encoder layers: fully unrolled, all weights VMEM-resident ----
    for l in range(NLAYERS):
        base = ROW_LAYER0 + l * ROWS_PER_LAYER
        # fused QKV projection; 1/sqrt(DH) already folded into the Q columns.
        qkv = mm(x, wqkv_ref[l]) + srow(base + 0, 3 * HID)       # [M, 3*HID]
        q = qkv[:, 0 * HID:1 * HID]
        k = qkv[:, 1 * HID:2 * HID]
        v = qkv[:, 2 * HID:3 * HID]

        def heads(t):                    # [M, HID] -> [NH, M, DH] bf16
            return jnp.stack([t[:, h * DH:(h + 1) * DH] for h in range(NH)]
                             ).astype(jnp.bfloat16)

        qh, kh, vh = heads(q), heads(k), heads(v)
        # one batched score matmul + one softmax over all heads
        s = jnp.einsum('hqd,hkd->hqk', qh, kh,
                       preferred_element_type=jnp.float32) + maskb  # [NH, M, M]
        s = s - jnp.max(s, axis=-1, keepdims=True)
        p = jnp.exp(s)
        p = p * pl.reciprocal(jnp.sum(p, axis=-1, keepdims=True), approx=True)
        ctx_h = jnp.einsum('hqk,hkd->hqd', p.astype(jnp.bfloat16), vh,
                           preferred_element_type=jnp.float32)      # [NH, M, DH]
        ctx = jnp.concatenate([ctx_h[h] for h in range(NH)], axis=-1)  # [M, HID]

        attn = mm(ctx, wo_ref[l]) + srow(base + 1, HID)
        x = layernorm(x + attn, srow(base + 2, HID), srow(base + 3, HID))
        # NOTE: tanh-approx GELU (HF BERT default is exact erf GELU) — tiny delta.
        ff = jax.nn.gelu(mm(x, w1_ref[l]) + srow(base + 4, FF), approximate=True)
        ff = mm(ff, w2_ref[l]) + srow(base + 5, HID)
        x = layernorm(x + ff, srow(base + 6, HID), srow(base + 7, HID))

    # ---- pooler + classifier + cross-entropy + argmax (fused, no HBM trip) ----
    # [CLS] rows (b*S) via static row slices — no matmul, no iota builds.
    cls = jnp.concatenate([x[b * S:b * S + 1, :] for b in range(B)], axis=0)  # [B, HID]

    pooled = jnp.tanh(mm(cls, wpc_ref[:, 0:HID]) + srow(ROW_BP, HID))
    logits = mm(pooled, wpc_ref[:, HID:HID + NLABELS]) + srow(ROW_BC, NLABELS)  # [B, C]

    labels = ids[0:B, 3:4]               # [B, 1] int32
    C = NLABELS
    mx = jnp.max(logits, axis=1, keepdims=True)
    lse = jnp.log(jnp.sum(jnp.exp(logits - mx), axis=1, keepdims=True)) + mx
    liota = jax.lax.broadcasted_iota(jnp.int32, (B, C), 1)
    onehot_l = (liota == labels).astype(jnp.float32)
    picked = jnp.sum(logits * onehot_l, axis=1, keepdims=True)
    loss_ref[...] = jnp.sum(lse - picked, axis=0, keepdims=True) * (1.0 / B)
    # argmax over dim=1 (first max index), via iota + min-reduce
    idx = jnp.where(logits == mx, liota, C)
    pred_ref[...] = jnp.min(idx, axis=1, keepdims=True).astype(jnp.int32)


# ------------------------------- model glue ---------------------------------
def init_params(key):
    ks = iter(jax.random.split(key, 32))

    def w(shape):
        return 0.02 * jax.random.normal(next(ks), shape, dtype=jnp.float32)

    zeros = lambda shape: jnp.zeros(shape, jnp.float32)
    ones = lambda shape: jnp.ones(shape, jnp.float32)

    word_emb = w((VOCAB, HID))
    type_emb = w((TYPES, HID))
    pos_emb = w((MAXPOS, HID))

    emb_ln_g, emb_ln_b = ones((HID,)), zeros((HID,))

    # fused QKV projection per layer; fold 1/sqrt(DH) into Q weights+bias.
    scale = 1.0 / (DH ** 0.5)
    wqkv = w((NLAYERS, HID, 3 * HID))
    wqkv = wqkv.at[:, :, 0:HID].multiply(scale)
    bqkv = zeros((NLAYERS, 3 * HID))
    bqkv = bqkv.at[:, 0:HID].multiply(scale)
    wo = w((NLAYERS, HID, HID)); bo = zeros((NLAYERS, HID))
    ln1_g = ones((NLAYERS, HID)); ln1_b = zeros((NLAYERS, HID))
    w1 = w((NLAYERS, HID, FF)); b1 = zeros((NLAYERS, FF))
    w2 = w((NLAYERS, FF, HID)); b2 = zeros((NLAYERS, HID))
    ln2_g = ones((NLAYERS, HID)); ln2_b = zeros((NLAYERS, HID))
    wp = w((HID, HID)); bp = zeros((HID,))
    wc = w((HID, NLABELS)); bc = zeros((NLABELS,))

    # --- pack every small f32 param into one [SM_ROWS, SM_W] buffer (one DMA) ---
    def row(v):
        v = v.reshape(-1)
        return jnp.pad(v, (0, SM_W - v.shape[0]))

    rows = [row(emb_ln_g), row(emb_ln_b)]
    for l in range(NLAYERS):
        rows += [row(bqkv[l]), row(bo[l]), row(ln1_g[l]), row(ln1_b[l]),
                 row(b1[l]), row(b2[l]), row(ln2_g[l]), row(ln2_b[l])]
    rows += [row(bp), row(bc)]
    smalls = jnp.stack(rows, axis=0)                     # [SM_ROWS, SM_W] f32

    return dict(
        # fused embedding table: word rows, then type rows, then position rows
        emb_table=jnp.concatenate([word_emb, type_emb, pos_emb[:S]], axis=0
                                  ).astype(jnp.bfloat16),           # [144, HID]
        wqkv=wqkv.astype(jnp.bfloat16),                  # [L, HID, 3*HID]
        wo=wo.astype(jnp.bfloat16),                      # [L, HID, HID]
        w1=w1.astype(jnp.bfloat16),                      # [L, HID, FF]
        w2=w2.astype(jnp.bfloat16),                      # [L, FF, HID]
        wpc=jnp.concatenate([wp, wc], axis=1).astype(jnp.bfloat16),  # [HID, HID+C]
        smalls=smalls,
    )


def forward(params, input_ids, token_type_ids, attention_mask, labels):
    """Returns (loss: scalar f32, predictions: [B] int32 argmax of logits)."""
    # pack all integer inputs into one [M, 4] buffer; type/pos ids pre-offset so
    # the kernel builds a single one-hot over the fused embedding table.
    wid = input_ids.reshape(M).astype(jnp.int32)
    tid = token_type_ids.reshape(M).astype(jnp.int32) + VOCAB
    pid = jnp.tile(jnp.arange(S, dtype=jnp.int32), B) + (VOCAB + TYPES)
    lab = jnp.zeros((M,), jnp.int32).at[0:B].set(labels.astype(jnp.int32))
    ids = jnp.stack([wid, tid, pid, lab], axis=1)        # [M, 4] int32

    # trace-time attention bias: padding mask folded with cross-batch blocking,
    # pre-broadcast to the batched [NH, M, M] score shape.
    key_bias = (1.0 - attention_mask.astype(jnp.float32)).reshape(1, M) * (-1e9)
    batch_of = jnp.arange(M, dtype=jnp.int32) // S
    same = batch_of[:, None] == batch_of[None, :]        # [M, M] block-diagonal
    maskb = jnp.where(same, key_bias, -1e9)              # [M, M]
    maskb = jnp.broadcast_to(maskb[None], (NH, M, M)).astype(jnp.float32)

    loss, preds = pl.pallas_call(
        _bert_fwd_kernel,
        out_shape=(jax.ShapeDtypeStruct((1, 1), jnp.float32),
                   jax.ShapeDtypeStruct((B, 1), jnp.int32)),
    )(ids, maskb, params["emb_table"],
      params["wqkv"], params["wo"], params["w1"], params["w2"],
      params["wpc"], params["smalls"])

    return loss.reshape(()), preds.reshape(B)


# ---------------------------------- main -------------------------------------
if __name__ == "__main__":
    key = jax.random.PRNGKey(0)
    k_params, k_ids, k_labels = jax.random.split(key, 3)

    params = init_params(k_params)

    input_ids = jax.random.randint(k_ids, (B, S), 0, VOCAB, dtype=jnp.int32)
    token_type_ids = jnp.zeros((B, S), jnp.int32)
    attention_mask = jnp.ones((B, S), jnp.int32).at[1, 6:].set(0)  # pad tail of row 1
    labels = jax.random.randint(k_labels, (B,), 0, NLABELS, dtype=jnp.int32)

    run = jax.jit(lambda ids, tt, am, lb: forward(params, ids, tt, am, lb))
    loss, predictions = run(input_ids, token_type_ids, attention_mask, labels)
    jax.block_until_ready((loss, predictions))

    # TODO(synk): dropout layers are omitted (eval-mode forward); exact erf GELU is
    # approximated with tanh; `save(path)` (torch.save checkpoint I/O) has no
    # kernel equivalent and is not implemented.
    print("KERNEL_OK")
</pallas_src>

<mosaic_0001>
module attributes {stable_mosaic.version = 11 : i64} {
  func.func @_bert_fwd_kernel(%arg0: memref<16x4xi32, #tpu.memory_space<vmem>>, %arg1: memref<2x16x16xf32, #tpu.memory_space<vmem>>, %arg2: memref<144x32xbf16, #tpu.memory_space<vmem>>, %arg3: memref<2x32x96xbf16, #tpu.memory_space<vmem>>, %arg4: memref<2x32x32xbf16, #tpu.memory_space<vmem>>, %arg5: memref<2x32x64xbf16, #tpu.memory_space<vmem>>, %arg6: memref<2x64x32xbf16, #tpu.memory_space<vmem>>, %arg7: memref<32x34xbf16, #tpu.memory_space<vmem>>, %arg8: memref<20x96xf32, #tpu.memory_space<vmem>>, %arg9: memref<1x1xf32, #tpu.memory_space<vmem>>, %arg10: memref<2x1xi32, #tpu.memory_space<vmem>>) attributes {dimension_semantics = [], scalar_prefetch = 0 : i64, scratch_operands = 0 : i64, tpu.core_type = #tpu.core_type<tc>} {
    %c0 = arith.constant 0 : index
    %c0_0 = arith.constant 0 : index
    %0 = vector.load %arg0[%c0, %c0_0] : memref<16x4xi32, #tpu.memory_space<vmem>>, vector<16x4xi32>
    %1 = vector.extract_strided_slice %0 {offsets = [0, 0], sizes = [16, 1], strides = [1, 1]} : vector<16x4xi32> to vector<16x1xi32>
    %2 = vector.extract_strided_slice %0 {offsets = [0, 1], sizes = [16, 1], strides = [1, 1]} : vector<16x4xi32> to vector<16x1xi32>
    %3 = vector.extract_strided_slice %0 {offsets = [0, 2], sizes = [16, 1], strides = [1, 1]} : vector<16x4xi32> to vector<16x1xi32>
    %4 = tpu.iota {dimensions = array<i32: 1>} : vector<16x144xi32>
    %5 = vector.broadcast %1 : vector<16x1xi32> to vector<16x144xi32>
    %6 = arith.cmpi eq, %4, %5 : vector<16x144xi32>
    %7 = vector.broadcast %2 : vector<16x1xi32> to vector<16x144xi32>
    %8 = arith.cmpi eq, %4, %7 : vector<16x144xi32>
    %9 = arith.ori %6, %8 : vector<16x144xi1>
    %10 = vector.broadcast %3 : vector<16x1xi32> to vector<16x144xi32>
    %11 = arith.cmpi eq, %4, %10 : vector<16x144xi32>
    %12 = arith.ori %9, %11 : vector<16x144xi1>
    %13 = arith.extui %12 : vector<16x144xi1> to vector<16x144xi32>
    %14 = arith.sitofp %13 : vector<16x144xi32> to vector<16x144xf32>
    %15 = arith.truncf %14 : vector<16x144xf32> to vector<16x144xbf16>
    %c0_1 = arith.constant 0 : index
    %c0_2 = arith.constant 0 : index
    %16 = vector.load %arg2[%c0_1, %c0_2] : memref<144x32xbf16, #tpu.memory_space<vmem>>, vector<144x32xbf16>
    %cst = arith.constant dense<0.000000e+00> : vector<16x32xf32>
    %17 = tpu.matmul %15, %16, %cst {dimension_numbers = #tpu.dot_dimension_numbers<[1], [0], [0], [1], [0, 0, 1, 1], [], []>} : vector<16x144xbf16>, vector<144x32xbf16>, vector<16x32xf32> -> vector<16x32xf32>
    %c0_3 = arith.constant 0 : index
    %c0_4 = arith.constant 0 : index
    %18 = vector.load %arg8[%c0_3, %c0_4] : memref<20x96xf32, #tpu.memory_space<vmem>>, vector<1x32xf32>
    %c1 = arith.constant 1 : index
    %c0_5 = arith.constant 0 : index
    %19 = vector.load %arg8[%c1, %c0_5] : memref<20x96xf32, #tpu.memory_space<vmem>>, vector<1x32xf32>
    %cst_6 = arith.constant dense<0.000000e+00> : vector<16xf32>
    %20 = vector.multi_reduction <add>, %17, %cst_6 [1] : vector<16x32xf32> to vector<16xf32>
    %21 = vector.shape_cast %20 : vector<16xf32> to vector<16x1xf32>
    %cst_7 = arith.constant 3.200000e+01 : f32
    %22 = vector.broadcast %cst_7 : f32 to vector<16x1xf32>
    %23 = arith.divf %21, %22 : vector<16x1xf32>
    %24 = vector.broadcast %23 : vector<16x1xf32> to vector<16x32xf32>
    %25 = arith.subf %17, %24 : vector<16x32xf32>
    %26 = arith.mulf %25, %25 : vector<16x32xf32>
    %cst_8 = arith.constant dense<0.000000e+00> : vector<16xf32>
    %27 = vector.multi_reduction <add>, %26, %cst_8 [1] : vector<16x32xf32> to vector<16xf32>
    %28 = vector.shape_cast %27 : vector<16xf32> to vector<16x1xf32>
    %cst_9 = arith.constant 3.200000e+01 : f32
    %29 = vector.broadcast %cst_9 : f32 to vector<16x1xf32>
    %30 = arith.divf %28, %29 : vector<16x1xf32>
    %31 = vector.broadcast %23 : vector<16x1xf32> to vector<16x32xf32>
    %32 = arith.subf %17, %31 : vector<16x32xf32>
    %cst_10 = arith.constant 9.99999996E-13 : f32
    %33 = vector.broadcast %cst_10 : f32 to vector<16x1xf32>
    %34 = arith.addf %30, %33 : vector<16x1xf32>
    %35 = math.rsqrt %34 : vector<16x1xf32>
    %36 = vector.broadcast %35 : vector<16x1xf32> to vector<16x32xf32>
    %37 = arith.mulf %32, %36 : vector<16x32xf32>
    %38 = vector.broadcast %18 : vector<1x32xf32> to vector<16x32xf32>
    %39 = arith.mulf %37, %38 : vector<16x32xf32>
    %40 = vector.broadcast %19 : vector<1x32xf32> to vector<16x32xf32>
    %41 = arith.addf %39, %40 : vector<16x32xf32>
    %c0_11 = arith.constant 0 : index
    %c0_12 = arith.constant 0 : index
    %c0_13 = arith.constant 0 : index
    %42 = vector.load %arg1[%c0_11, %c0_12, %c0_13] : memref<2x16x16xf32, #tpu.memory_space<vmem>>, vector<2x16x16xf32>
    %c0_14 = arith.constant 0 : index
    %c0_15 = arith.constant 0 : index
    %c0_16 = arith.constant 0 : index
    %43 = vector.load %arg3[%c0_14, %c0_15, %c0_16] : memref<2x32x96xbf16, #tpu.memory_space<vmem>>, vector<1x32x96xbf16>
    %44 = vector.shape_cast %43 : vector<1x32x96xbf16> to vector<32x96xbf16>
    %45 = arith.truncf %41 : vector<16x32xf32> to vector<16x32xbf16>
    %cst_17 = arith.constant dense<0.000000e+00> : vector<16x96xf32>
    %46 = tpu.matmul %45, %44, %cst_17 {dimension_numbers = #tpu.dot_dimension_numbers<[1], [0], [0], [1], [0, 0, 1, 1], [], []>} : vector<16x32xbf16>, vector<32x96xbf16>, vector<16x96xf32> -> vector<16x96xf32>
    %c2 = arith.constant 2 : index
    %c0_18 = arith.constant 0 : index
    %47 = vector.load %arg8[%c2, %c0_18] : memref<20x96xf32, #tpu.memory_space<vmem>>, vector<1x96xf32>
    %48 = vector.broadcast %47 : vector<1x96xf32> to vector<16x96xf32>
    %49 = arith.addf %46, %48 : vector<16x96xf32>
    %50 = vector.extract_strided_slice %49 {offsets = [0, 0], sizes = [16, 32], strides = [1, 1]} : vector<16x96xf32> to vector<16x32xf32>
    %51 = vector.extract_strided_slice %49 {offsets = [0, 32], sizes = [16, 32], strides = [1, 1]} : vector<16x96xf32> to vector<16x32xf32>
    %52 = vector.extract_strided_slice %49 {offsets = [0, 64], sizes = [16, 32], strides = [1, 1]} : vector<16x96xf32> to vector<16x32xf32>
    %53 = vector.extract_strided_slice %50 {offsets = [0, 0], sizes = [16, 16], strides = [1, 1]} : vector<16x32xf32> to vector<16x16xf32>
    %54 = vector.extract_strided_slice %50 {offsets = [0, 16], sizes = [16, 16], strides = [1, 1]} : vector<16x32xf32> to vector<16x16xf32>
    %55 = vector.shape_cast %53 : vector<16x16xf32> to vector<1x16x16xf32>
    %56 = vector.shape_cast %54 : vector<16x16xf32> to vector<1x16x16xf32>
    %57 = tpu.concatenate %55, %56 in 0 : vector<1x16x16xf32>, vector<1x16x16xf32> -> vector<2x16x16xf32>
    %58 = arith.truncf %57 : vector<2x16x16xf32> to vector<2x16x16xbf16>
    %59 = vector.extract_strided_slice %51 {offsets = [0, 0], sizes = [16, 16], strides = [1, 1]} : vector<16x32xf32> to vector<16x16xf32>
    %60 = vector.extract_strided_slice %51 {offsets = [0, 16], sizes = [16, 16], strides = [1, 1]} : vector<16x32xf32> to vector<16x16xf32>
    %61 = vector.shape_cast %59 : vector<16x16xf32> to vector<1x16x16xf32>
    %62 = vector.shape_cast %60 : vector<16x16xf32> to vector<1x16x16xf32>
    %63 = tpu.concatenate %61, %62 in 0 : vector<1x16x16xf32>, vector<1x16x16xf32> -> vector<2x16x16xf32>
    %64 = arith.truncf %63 : vector<2x16x16xf32> to vector<2x16x16xbf16>
    %65 = vector.extract_strided_slice %52 {offsets = [0, 0], sizes = [16, 16], strides = [1, 1]} : vector<16x32xf32> to vector<16x16xf32>
    %66 = vector.extract_strided_slice %52 {offsets = [0, 16], sizes = [16, 16], strides = [1, 1]} : vector<16x32xf32> to vector<16x16xf32>
    %67 = vector.shape_cast %65 : vector<16x16xf32> to vector<1x16x16xf32>
    %68 = vector.shape_cast %66 : vector<16x16xf32> to vector<1x16x16xf32>
    %69 = tpu.concatenate %67, %68 in 0 : vector<1x16x16xf32>, vector<1x16x16xf32> -> vector<2x16x16xf32>
    %70 = arith.truncf %69 : vector<2x16x16xf32> to vector<2x16x16xbf16>
    "tpu.trace_start"() <{level = 10 : i32, message = "hqd,hkd->hqk"}> : () -> ()
    %cst_19 = arith.constant dense<0.000000e+00> : vector<2x16x16xf32>
    %71 = tpu.matmul %58, %64, %cst_19 {dimension_numbers = #tpu.dot_dimension_numbers<[2], [2], [1], [1], [0, 0, 0, 1, 1, 1], [0], [0]>} : vector<2x16x16xbf16>, vector<2x16x16xbf16>, vector<2x16x16xf32> -> vector<2x16x16xf32>
    "tpu.trace_stop"() : () -> ()
    %72 = arith.addf %71, %42 : vector<2x16x16xf32>
    %cst_20 = arith.constant dense<0xFF800000> : vector<2x16xf32>
    %73 = vector.multi_reduction <maximumf>, %72, %cst_20 [2] : vector<2x16x16xf32> to vector<2x16xf32>
    %74 = vector.shape_cast %73 : vector<2x16xf32> to vector<2x16x1xf32>
    %75 = vector.broadcast %74 : vector<2x16x1xf32> to vector<2x16x16xf32>
    %76 = arith.subf %72, %75 : vector<2x16x16xf32>
    %77 = math.exp %76 : vector<2x16x16xf32>
    %cst_21 = arith.constant dense<0.000000e+00> : vector<2x16xf32>
    %78 = vector.multi_reduction <add>, %77, %cst_21 [2] : vector<2x16x16xf32> to vector<2x16xf32>
    %79 = vector.shape_cast %78 : vector<2x16xf32> to vector<2x16x1xf32>
    %80 = tpu.reciprocal %79 {approx = true} : vector<2x16x1xf32> -> vector<2x16x1xf32>
    %81 = vector.broadcast %80 : vector<2x16x1xf32> to vector<2x16x16xf32>
    %82 = arith.mulf %77, %81 : vector<2x16x16xf32>
    %83 = arith.truncf %82 : vector<2x16x16xf32> to vector<2x16x16xbf16>
    "tpu.trace_start"() <{level = 10 : i32, message = "hqk,hkd->hqd"}> : () -> ()
    %cst_22 = arith.constant dense<0.000000e+00> : vector<2x16x16xf32>
    %84 = tpu.matmul %83, %70, %cst_22 {dimension_numbers = #tpu.dot_dimension_numbers<[2], [1], [1], [2], [0, 0, 0, 1, 1, 2], [0], [0]>} : vector<2x16x16xbf16>, vector<2x16x16xbf16>, vector<2x16x16xf32> -> vector<2x16x16xf32>
    "tpu.trace_stop"() : () -> ()
    %85 = vector.extract_strided_slice %84 {offsets = [0, 0, 0], sizes = [1, 16, 16], strides = [1, 1, 1]} : vector<2x16x16xf32> to vector<1x16x16xf32>
    %86 = vector.shape_cast %85 : vector<1x16x16xf32> to vector<16x16xf32>
    %87 = vector.extract_strided_slice %84 {offsets = [1, 0, 0], sizes = [1, 16, 16], strides = [1, 1, 1]} : vector<2x16x16xf32> to vector<1x16x16xf32>
    %88 = vector.shape_cast %87 : vector<1x16x16xf32> to vector<16x16xf32>
    %89 = tpu.concatenate %86, %88 in 1 : vector<16x16xf32>, vector<16x16xf32> -> vector<16x32xf32>
    %c0_23 = arith.constant 0 : index
    %c0_24 = arith.constant 0 : index
    %c0_25 = arith.constant 0 : index
    %90 = vector.load %arg4[%c0_23, %c0_24, %c0_25] : memref<2x32x32xbf16, #tpu.memory_space<vmem>>, vector<1x32x32xbf16>
    %91 = vector.shape_cast %90 : vector<1x32x32xbf16> to vector<32x32xbf16>
    %92 = arith.truncf %89 : vector<16x32xf32> to vector<16x32xbf16>
    %cst_26 = arith.constant dense<0.000000e+00> : vector<16x32xf32>
    %93 = tpu.matmul %92, %91, %cst_26 {dimension_numbers = #tpu.dot_dimension_numbers<[1], [0], [0], [1], [0, 0, 1, 1], [], []>} : vector<16x32xbf16>, vector<32x32xbf16>, vector<16x32xf32> -> vector<16x32xf32>
    %c3 = arith.constant 3 : index
    %c0_27 = arith.constant 0 : index
    %94 = vector.load %arg8[%c3, %c0_27] : memref<20x96xf32, #tpu.memory_space<vmem>>, vector<1x32xf32>
    %95 = vector.broadcast %94 : vector<1x32xf32> to vector<16x32xf32>
    %96 = arith.addf %93, %95 : vector<16x32xf32>
    %97 = arith.addf %41, %96 : vector<16x32xf32>
    %c4 = arith.constant 4 : index
    %c0_28 = arith.constant 0 : index
    %98 = vector.load %arg8[%c4, %c0_28] : memref<20x96xf32, #tpu.memory_space<vmem>>, vector<1x32xf32>
    %c5 = arith.constant 5 : index
    %c0_29 = arith.constant 0 : index
    %99 = vector.load %arg8[%c5, %c0_29] : memref<20x96xf32, #tpu.memory_space<vmem>>, vector<1x32xf32>
    %cst_30 = arith.constant dense<0.000000e+00> : vector<16xf32>
    %100 = vector.multi_reduction <add>, %97, %cst_30 [1] : vector<16x32xf32> to vector<16xf32>
    %101 = vector.shape_cast %100 : vector<16xf32> to vector<16x1xf32>
    %cst_31 = arith.constant 3.200000e+01 : f32
    %102 = vector.broadcast %cst_31 : f32 to vector<16x1xf32>
    %103 = arith.divf %101, %102 : vector<16x1xf32>
    %104 = vector.broadcast %103 : vector<16x1xf32> to vector<16x32xf32>
    %105 = arith.subf %97, %104 : vector<16x32xf32>
    %106 = arith.mulf %105, %105 : vector<16x32xf32>
    %cst_32 = arith.constant dense<0.000000e+00> : vector<16xf32>
    %107 = vector.multi_reduction <add>, %106, %cst_32 [1] : vector<16x32xf32> to vector<16xf32>
    %108 = vector.shape_cast %107 : vector<16xf32> to vector<16x1xf32>
    %cst_33 = arith.constant 3.200000e+01 : f32
    %109 = vector.broadcast %cst_33 : f32 to vector<16x1xf32>
    %110 = arith.divf %108, %109 : vector<16x1xf32>
    %111 = vector.broadcast %103 : vector<16x1xf32> to vector<16x32xf32>
    %112 = arith.subf %97, %111 : vector<16x32xf32>
    %cst_34 = arith.constant 9.99999996E-13 : f32
    %113 = vector.broadcast %cst_34 : f32 to vector<16x1xf32>
    %114 = arith.addf %110, %113 : vector<16x1xf32>
    %115 = math.rsqrt %114 : vector<16x1xf32>
    %116 = vector.broadcast %115 : vector<16x1xf32> to vector<16x32xf32>
    %117 = arith.mulf %112, %116 : vector<16x32xf32>
    %118 = vector.broadcast %98 : vector<1x32xf32> to vector<16x32xf32>
    %119 = arith.mulf %117, %118 : vector<16x32xf32>
    %120 = vector.broadcast %99 : vector<1x32xf32> to vector<16x32xf32>
    %121 = arith.addf %119, %120 : vector<16x32xf32>
    %c0_35 = arith.constant 0 : index
    %c0_36 = arith.constant 0 : index
    %c0_37 = arith.constant 0 : index
    %122 = vector.load %arg5[%c0_35, %c0_36, %c0_37] : memref<2x32x64xbf16, #tpu.memory_space<vmem>>, vector<1x32x64xbf16>
    %123 = vector.shape_cast %122 : vector<1x32x64xbf16> to vector<32x64xbf16>
    %124 = arith.truncf %121 : vector<16x32xf32> to vector<16x32xbf16>
    %cst_38 = arith.constant dense<0.000000e+00> : vector<16x64xf32>
    %125 = tpu.matmul %124, %123, %cst_38 {dimension_numbers = #tpu.dot_dimension_numbers<[1], [0], [0], [1], [0, 0, 1, 1], [], []>} : vector<16x32xbf16>, vector<32x64xbf16>, vector<16x64xf32> -> vector<16x64xf32>
    %c6 = arith.constant 6 : index
    %c0_39 = arith.constant 0 : index
    %126 = vector.load %arg8[%c6, %c0_39] : memref<20x96xf32, #tpu.memory_space<vmem>>, vector<1x64xf32>
    %127 = vector.broadcast %126 : vector<1x64xf32> to vector<16x64xf32>
    %128 = arith.addf %125, %127 : vector<16x64xf32>
    %129 = arith.mulf %128, %128 : vector<16x64xf32>
    %130 = arith.mulf %128, %129 : vector<16x64xf32>
    %cst_40 = arith.constant 4.471500e-02 : f32
    %131 = vector.broadcast %cst_40 : f32 to vector<16x64xf32>
    %132 = arith.mulf %131, %130 : vector<16x64xf32>
    %133 = arith.addf %128, %132 : vector<16x64xf32>
    %cst_41 = arith.constant 0.797884583 : f32
    %134 = vector.broadcast %cst_41 : f32 to vector<16x64xf32>
    %135 = arith.mulf %134, %133 : vector<16x64xf32>
    %136 = math.tanh %135 : vector<16x64xf32>
    %cst_42 = arith.constant 1.000000e+00 : f32
    %137 = vector.broadcast %cst_42 : f32 to vector<16x64xf32>
    %138 = arith.addf %137, %136 : vector<16x64xf32>
    %cst_43 = arith.constant 5.000000e-01 : f32
    %139 = vector.broadcast %cst_43 : f32 to vector<16x64xf32>
    %140 = arith.mulf %139, %138 : vector<16x64xf32>
    %141 = arith.mulf %128, %140 : vector<16x64xf32>
    %c0_44 = arith.constant 0 : index
    %c0_45 = arith.constant 0 : index
    %c0_46 = arith.constant 0 : index
    %142 = vector.load %arg6[%c0_44, %c0_45, %c0_46] : memref<2x64x32xbf16, #tpu.memory_space<vmem>>, vector<1x64x32xbf16>
    %143 = vector.shape_cast %142 : vector<1x64x32xbf16> to vector<64x32xbf16>
    %144 = arith.truncf %141 : vector<16x64xf32> to vector<16x64xbf16>
    %cst_47 = arith.constant dense<0.000000e+00> : vector<16x32xf32>
    %145 = tpu.matmul %144, %143, %cst_47 {dimension_numbers = #tpu.dot_dimension_numbers<[1], [0], [0], [1], [0, 0, 1, 1], [], []>} : vector<16x64xbf16>, vector<64x32xbf16>, vector<16x32xf32> -> vector<16x32xf32>
    %c7 = arith.constant 7 : index
    %c0_48 = arith.constant 0 : index
    %146 = vector.load %arg8[%c7, %c0_48] : memref<20x96xf32, #tpu.memory_space<vmem>>, vector<1x32xf32>
    %147 = vector.broadcast %146 : vector<1x32xf32> to vector<16x32xf32>
    %148 = arith.addf %145, %147 : vector<16x32xf32>
    %149 = arith.addf %121, %148 : vector<16x32xf32>
    %c8 = arith.constant 8 : index
    %c0_49 = arith.constant 0 : index
    %150 = vector.load %arg8[%c8, %c0_49] : memref<20x96xf32, #tpu.memory_space<vmem>>, vector<1x32xf32>
    %c9 = arith.constant 9 : index
    %c0_50 = arith.constant 0 : index
    %151 = vector.load %arg8[%c9, %c0_50] : memref<20x96xf32, #tpu.memory_space<vmem>>, vector<1x32xf32>
    %cst_51 = arith.constant dense<0.000000e+00> : vector<16xf32>
    %152 = vector.multi_reduction <add>, %149, %cst_51 [1] : vector<16x32xf32> to vector<16xf32>
    %153 = vector.shape_cast %152 : vector<16xf32> to vector<16x1xf32>
    %cst_52 = arith.constant 3.200000e+01 : f32
    %154 = vector.broadcast %cst_52 : f32 to vector<16x1xf32>
    %155 = arith.divf %153, %154 : vector<16x1xf32>
    %156 = vector.broadcast %155 : vector<16x1xf32> to vector<16x32xf32>
    %157 = arith.subf %149, %156 : vector<16x32xf32>
    %158 = arith.mulf %157, %157 : vector<16x32xf32>
    %cst_53 = arith.constant dense<0.000000e+00> : vector<16xf32>
    %159 = vector.multi_reduction <add>, %158, %cst_53 [1] : vector<16x32xf32> to vector<16xf32>
    %160 = vector.shape_cast %159 : vector<16xf32> to vector<16x1xf32>
    %cst_54 = arith.constant 3.200000e+01 : f32
    %161 = vector.broadcast %cst_54 : f32 to vector<16x1xf32>
    %162 = arith.divf %160, %161 : vector<16x1xf32>
    %163 = vector.broadcast %155 : vector<16x1xf32> to vector<16x32xf32>
    %164 = arith.subf %149, %163 : vector<16x32xf32>
    %cst_55 = arith.constant 9.99999996E-13 : f32
    %165 = vector.broadcast %cst_55 : f32 to vector<16x1xf32>
    %166 = arith.addf %162, %165 : vector<16x1xf32>
    %167 = math.rsqrt %166 : vector<16x1xf32>
    %168 = vector.broadcast %167 : vector<16x1xf32> to vector<16x32xf32>
    %169 = arith.mulf %164, %168 : vector<16x32xf32>
    %170 = vector.broadcast %150 : vector<1x32xf32> to vector<16x32xf32>
    %171 = arith.mulf %169, %170 : vector<16x32xf32>
    %172 = vector.broadcast %151 : vector<1x32xf32> to vector<16x32xf32>
    %173 = arith.addf %171, %172 : vector<16x32xf32>
    %c1_56 = arith.constant 1 : index
    %c0_57 = arith.constant 0 : index
    %c0_58 = arith.constant 0 : index
    %174 = vector.load %arg3[%c1_56, %c0_57, %c0_58] : memref<2x32x96xbf16, #tpu.memory_space<vmem>>, vector<1x32x96xbf16>
    %175 = vector.shape_cast %174 : vector<1x32x96xbf16> to vector<32x96xbf16>
    %176 = arith.truncf %173 : vector<16x32xf32> to vector<16x32xbf16>
    %cst_59 = arith.constant dense<0.000000e+00> : vector<16x96xf32>
    %177 = tpu.matmul %176, %175, %cst_59 {dimension_numbers = #tpu.dot_dimension_numbers<[1], [0], [0], [1], [0, 0, 1, 1], [], []>} : vector<16x32xbf16>, vector<32x96xbf16>, vector<16x96xf32> -> vector<16x96xf32>
    %c10 = arith.constant 10 : index
    %c0_60 = arith.constant 0 : index
    %178 = vector.load %arg8[%c10, %c0_60] : memref<20x96xf32, #tpu.memory_space<vmem>>, vector<1x96xf32>
    %179 = vector.broadcast %178 : vector<1x96xf32> to vector<16x96xf32>
    %180 = arith.addf %177, %179 : vector<16x96xf32>
    %181 = vector.extract_strided_slice %180 {offsets = [0, 0], sizes = [16, 32], strides = [1, 1]} : vector<16x96xf32> to vector<16x32xf32>
    %182 = vector.extract_strided_slice %180 {offsets = [0, 32], sizes = [16, 32], strides = [1, 1]} : vector<16x96xf32> to vector<16x32xf32>
    %183 = vector.extract_strided_slice %180 {offsets = [0, 64], sizes = [16, 32], strides = [1, 1]} : vector<16x96xf32> to vector<16x32xf32>
    %184 = vector.extract_strided_slice %181 {offsets = [0, 0], sizes = [16, 16], strides = [1, 1]} : vector<16x32xf32> to vector<16x16xf32>
    %185 = vector.extract_strided_slice %181 {offsets = [0, 16], sizes = [16, 16], strides = [1, 1]} : vector<16x32xf32> to vector<16x16xf32>
    %186 = vector.shape_cast %184 : vector<16x16xf32> to vector<1x16x16xf32>
    %187 = vector.shape_cast %185 : vector<16x16xf32> to vector<1x16x16xf32>
    %188 = tpu.concatenate %186, %187 in 0 : vector<1x16x16xf32>, vector<1x16x16xf32> -> vector<2x16x16xf32>
    %189 = arith.truncf %188 : vector<2x16x16xf32> to vector<2x16x16xbf16>
    %190 = vector.extract_strided_slice %182 {offsets = [0, 0], sizes = [16, 16], strides = [1, 1]} : vector<16x32xf32> to vector<16x16xf32>
    %191 = vector.extract_strided_slice %182 {offsets = [0, 16], sizes = [16, 16], strides = [1, 1]} : vector<16x32xf32> to vector<16x16xf32>
    %192 = vector.shape_cast %190 : vector<16x16xf32> to vector<1x16x16xf32>
    %193 = vector.shape_cast %191 : vector<16x16xf32> to vector<1x16x16xf32>
    %194 = tpu.concatenate %192, %193 in 0 : vector<1x16x16xf32>, vector<1x16x16xf32> -> vector<2x16x16xf32>
    %195 = arith.truncf %194 : vector<2x16x16xf32> to vector<2x16x16xbf16>
    %196 = vector.extract_strided_slice %183 {offsets = [0, 0], sizes = [16, 16], strides = [1, 1]} : vector<16x32xf32> to vector<16x16xf32>
    %197 = vector.extract_strided_slice %183 {offsets = [0, 16], sizes = [16, 16], strides = [1, 1]} : vector<16x32xf32> to vector<16x16xf32>
    %198 = vector.shape_cast %196 : vector<16x16xf32> to vector<1x16x16xf32>
    %199 = vector.shape_cast %197 : vector<16x16xf32> to vector<1x16x16xf32>
    %200 = tpu.concatenate %198, %199 in 0 : vector<1x16x16xf32>, vector<1x16x16xf32> -> vector<2x16x16xf32>
    %201 = arith.truncf %200 : vector<2x16x16xf32> to vector<2x16x16xbf16>
    "tpu.trace_start"() <{level = 10 : i32, message = "hqd,hkd->hqk"}> : () -> ()
    %cst_61 = arith.constant dense<0.000000e+00> : vector<2x16x16xf32>
    %202 = tpu.matmul %189, %195, %cst_61 {dimension_numbers = #tpu.dot_dimension_numbers<[2], [2], [1], [1], [0, 0, 0, 1, 1, 1], [0], [0]>} : vector<2x16x16xbf16>, vector<2x16x16xbf16>, vector<2x16x16xf32> -> vector<2x16x16xf32>
    "tpu.trace_stop"() : () -> ()
    %203 = arith.addf %202, %42 : vector<2x16x16xf32>
    %cst_62 = arith.constant dense<0xFF800000> : vector<2x16xf32>
    %204 = vector.multi_reduction <maximumf>, %203, %cst_62 [2] : vector<2x16x16xf32> to vector<2x16xf32>
    %205 = vector.shape_cast %204 : vector<2x16xf32> to vector<2x16x1xf32>
    %206 = vector.broadcast %205 : vector<2x16x1xf32> to vector<2x16x16xf32>
    %207 = arith.subf %203, %206 : vector<2x16x16xf32>
    %208 = math.exp %207 : vector<2x16x16xf32>
    %cst_63 = arith.constant dense<0.000000e+00> : vector<2x16xf32>
    %209 = vector.multi_reduction <add>, %208, %cst_63 [2] : vector<2x16x16xf32> to vector<2x16xf32>
    %210 = vector.shape_cast %209 : vector<2x16xf32> to vector<2x16x1xf32>
    %211 = tpu.reciprocal %210 {approx = true} : vector<2x16x1xf32> -> vector<2x16x1xf32>
    %212 = vector.broadcast %211 : vector<2x16x1xf32> to vector<2x16x16xf32>
    %213 = arith.mulf %208, %212 : vector<2x16x16xf32>
    %214 = arith.truncf %213 : vector<2x16x16xf32> to vector<2x16x16xbf16>
    "tpu.trace_start"() <{level = 10 : i32, message = "hqk,hkd->hqd"}> : () -> ()
    %cst_64 = arith.constant dense<0.000000e+00> : vector<2x16x16xf32>
    %215 = tpu.matmul %214, %201, %cst_64 {dimension_numbers = #tpu.dot_dimension_numbers<[2], [1], [1], [2], [0, 0, 0, 1, 1, 2], [0], [0]>} : vector<2x16x16xbf16>, vector<2x16x16xbf16>, vector<2x16x16xf32> -> vector<2x16x16xf32>
    "tpu.trace_stop"() : () -> ()
    %216 = vector.extract_strided_slice %215 {offsets = [0, 0, 0], sizes = [1, 16, 16], strides = [1, 1, 1]} : vector<2x16x16xf32> to vector<1x16x16xf32>
    %217 = vector.shape_cast %216 : vector<1x16x16xf32> to vector<16x16xf32>
    %218 = vector.extract_strided_slice %215 {offsets = [1, 0, 0], sizes = [1, 16, 16], strides = [1, 1, 1]} : vector<2x16x16xf32> to vector<1x16x16xf32>
    %219 = vector.shape_cast %218 : vector<1x16x16xf32> to vector<16x16xf32>
    %220 = tpu.concatenate %217, %219 in 1 : vector<16x16xf32>, vector<16x16xf32> -> vector<16x32xf32>
    %c1_65 = arith.constant 1 : index
    %c0_66 = arith.constant 0 : index
    %c0_67 = arith.constant 0 : index
    %221 = vector.load %arg4[%c1_65, %c0_66, %c0_67] : memref<2x32x32xbf16, #tpu.memory_space<vmem>>, vector<1x32x32xbf16>
    %222 = vector.shape_cast %221 : vector<1x32x32xbf16> to vector<32x32xbf16>
    %223 = arith.truncf %220 : vector<16x32xf32> to vector<16x32xbf16>
    %cst_68 = arith.constant dense<0.000000e+00> : vector<16x32xf32>
    %224 = tpu.matmul %223, %222, %cst_68 {dimension_numbers = #tpu.dot_dimension_numbers<[1], [0], [0], [1], [0, 0, 1, 1], [], []>} : vector<16x32xbf16>, vector<32x32xbf16>, vector<16x32xf32> -> vector<16x32xf32>
    %c11 = arith.constant 11 : index
    %c0_69 = arith.constant 0 : index
    %225 = vector.load %arg8[%c11, %c0_69] : memref<20x96xf32, #tpu.memory_space<vmem>>, vector<1x32xf32>
    %226 = vector.broadcast %225 : vector<1x32xf32> to vector<16x32xf32>
    %227 = arith.addf %224, %226 : vector<16x32xf32>
    %228 = arith.addf %173, %227 : vector<16x32xf32>
    %c12 = arith.constant 12 : index
    %c0_70 = arith.constant 0 : index
    %229 = vector.load %arg8[%c12, %c0_70] : memref<20x96xf32, #tpu.memory_space<vmem>>, vector<1x32xf32>
    %c13 = arith.constant 13 : index
    %c0_71 = arith.constant 0 : index
    %230 = vector.load %arg8[%c13, %c0_71] : memref<20x96xf32, #tpu.memory_space<vmem>>, vector<1x32xf32>
    %cst_72 = arith.constant dense<0.000000e+00> : vector<16xf32>
    %231 = vector.multi_reduction <add>, %228, %cst_72 [1] : vector<16x32xf32> to vector<16xf32>
    %232 = vector.shape_cast %231 : vector<16xf32> to vector<16x1xf32>
    %cst_73 = arith.constant 3.200000e+01 : f32
    %233 = vector.broadcast %cst_73 : f32 to vector<16x1xf32>
    %234 = arith.divf %232, %233 : vector<16x1xf32>
    %235 = vector.broadcast %234 : vector<16x1xf32> to vector<16x32xf32>
    %236 = arith.subf %228, %235 : vector<16x32xf32>
    %237 = arith.mulf %236, %236 : vector<16x32xf32>
    %cst_74 = arith.constant dense<0.000000e+00> : vector<16xf32>
    %238 = vector.multi_reduction <add>, %237, %cst_74 [1] : vector<16x32xf32> to vector<16xf32>
    %239 = vector.shape_cast %238 : vector<16xf32> to vector<16x1xf32>
    %cst_75 = arith.constant 3.200000e+01 : f32
    %240 = vector.broadcast %cst_75 : f32 to vector<16x1xf32>
    %241 = arith.divf %239, %240 : vector<16x1xf32>
    %242 = vector.broadcast %234 : vector<16x1xf32> to vector<16x32xf32>
    %243 = arith.subf %228, %242 : vector<16x32xf32>
    %cst_76 = arith.constant 9.99999996E-13 : f32
    %244 = vector.broadcast %cst_76 : f32 to vector<16x1xf32>
    %245 = arith.addf %241, %244 : vector<16x1xf32>
    %246 = math.rsqrt %245 : vector<16x1xf32>
    %247 = vector.broadcast %246 : vector<16x1xf32> to vector<16x32xf32>
    %248 = arith.mulf %243, %247 : vector<16x32xf32>
    %249 = vector.broadcast %229 : vector<1x32xf32> to vector<16x32xf32>
    %250 = arith.mulf %248, %249 : vector<16x32xf32>
    %251 = vector.broadcast %230 : vector<1x32xf32> to vector<16x32xf32>
    %252 = arith.addf %250, %251 : vector<16x32xf32>
    %c1_77 = arith.constant 1 : index
    %c0_78 = arith.constant 0 : index
    %c0_79 = arith.constant 0 : index
    %253 = vector.load %arg5[%c1_77, %c0_78, %c0_79] : memref<2x32x64xbf16, #tpu.memory_space<vmem>>, vector<1x32x64xbf16>
    %254 = vector.shape_cast %253 : vector<1x32x64xbf16> to vector<32x64xbf16>
    %255 = arith.truncf %252 : vector<16x32xf32> to vector<16x32xbf16>
    %cst_80 = arith.constant dense<0.000000e+00> : vector<16x64xf32>
    %256 = tpu.matmul %255, %254, %cst_80 {dimension_numbers = #tpu.dot_dimension_numbers<[1], [0], [0], [1], [0, 0, 1, 1], [], []>} : vector<16x32xbf16>, vector<32x64xbf16>, vector<16x64xf32> -> vector<16x64xf32>
    %c14 = arith.constant 14 : index
    %c0_81 = arith.constant 0 : index
    %257 = vector.load %arg8[%c14, %c0_81] : memref<20x96xf32, #tpu.memory_space<vmem>>, vector<1x64xf32>
    %258 = vector.broadcast %257 : vector<1x64xf32> to vector<16x64xf32>
    %259 = arith.addf %256, %258 : vector<16x64xf32>
    %260 = arith.mulf %259, %259 : vector<16x64xf32>
    %261 = arith.mulf %259, %260 : vector<16x64xf32>
    %cst_82 = arith.constant 4.471500e-02 : f32
    %262 = vector.broadcast %cst_82 : f32 to vector<16x64xf32>
    %263 = arith.mulf %262, %261 : vector<16x64xf32>
    %264 = arith.addf %259, %263 : vector<16x64xf32>
    %cst_83 = arith.constant 0.797884583 : f32
    %265 = vector.broadcast %cst_83 : f32 to vector<16x64xf32>
    %266 = arith.mulf %265, %264 : vector<16x64xf32>
    %267 = math.tanh %266 : vector<16x64xf32>
    %cst_84 = arith.constant 1.000000e+00 : f32
    %268 = vector.broadcast %cst_84 : f32 to vector<16x64xf32>
    %269 = arith.addf %268, %267 : vector<16x64xf32>
    %cst_85 = arith.constant 5.000000e-01 : f32
    %270 = vector.broadcast %cst_85 : f32 to vector<16x64xf32>
    %271 = arith.mulf %270, %269 : vector<16x64xf32>
    %272 = arith.mulf %259, %271 : vector<16x64xf32>
    %c1_86 = arith.constant 1 : index
    %c0_87 = arith.constant 0 : index
    %c0_88 = arith.constant 0 : index
    %273 = vector.load %arg6[%c1_86, %c0_87, %c0_88] : memref<2x64x32xbf16, #tpu.memory_space<vmem>>, vector<1x64x32xbf16>
    %274 = vector.shape_cast %273 : vector<1x64x32xbf16> to vector<64x32xbf16>
    %275 = arith.truncf %272 : vector<16x64xf32> to vector<16x64xbf16>
    %cst_89 = arith.constant dense<0.000000e+00> : vector<16x32xf32>
    %276 = tpu.matmul %275, %274, %cst_89 {dimension_numbers = #tpu.dot_dimension_numbers<[1], [0], [0], [1], [0, 0, 1, 1], [], []>} : vector<16x64xbf16>, vector<64x32xbf16>, vector<16x32xf32> -> vector<16x32xf32>
    %c15 = arith.constant 15 : index
    %c0_90 = arith.constant 0 : index
    %277 = vector.load %arg8[%c15, %c0_90] : memref<20x96xf32, #tpu.memory_space<vmem>>, vector<1x32xf32>
    %278 = vector.broadcast %277 : vector<1x32xf32> to vector<16x32xf32>
    %279 = arith.addf %276, %278 : vector<16x32xf32>
    %280 = arith.addf %252, %279 : vector<16x32xf32>
    %c16 = arith.constant 16 : index
    %c0_91 = arith.constant 0 : index
    %281 = vector.load %arg8[%c16, %c0_91] : memref<20x96xf32, #tpu.memory_space<vmem>>, vector<1x32xf32>
    %c17 = arith.constant 17 : index
    %c0_92 = arith.constant 0 : index
    %282 = vector.load %arg8[%c17, %c0_92] : memref<20x96xf32, #tpu.memory_space<vmem>>, vector<1x32xf32>
    %cst_93 = arith.constant dense<0.000000e+00> : vector<16xf32>
    %283 = vector.multi_reduction <add>, %280, %cst_93 [1] : vector<16x32xf32> to vector<16xf32>
    %284 = vector.shape_cast %283 : vector<16xf32> to vector<16x1xf32>
    %cst_94 = arith.constant 3.200000e+01 : f32
    %285 = vector.broadcast %cst_94 : f32 to vector<16x1xf32>
    %286 = arith.divf %284, %285 : vector<16x1xf32>
    %287 = vector.broadcast %286 : vector<16x1xf32> to vector<16x32xf32>
    %288 = arith.subf %280, %287 : vector<16x32xf32>
    %289 = arith.mulf %288, %288 : vector<16x32xf32>
    %cst_95 = arith.constant dense<0.000000e+00> : vector<16xf32>
    %290 = vector.multi_reduction <add>, %289, %cst_95 [1] : vector<16x32xf32> to vector<16xf32>
    %291 = vector.shape_cast %290 : vector<16xf32> to vector<16x1xf32>
    %cst_96 = arith.constant 3.200000e+01 : f32
    %292 = vector.broadcast %cst_96 : f32 to vector<16x1xf32>
    %293 = arith.divf %291, %292 : vector<16x1xf32>
    %294 = vector.broadcast %286 : vector<16x1xf32> to vector<16x32xf32>
    %295 = arith.subf %280, %294 : vector<16x32xf32>
    %cst_97 = arith.constant 9.99999996E-13 : f32
    %296 = vector.broadcast %cst_97 : f32 to vector<16x1xf32>
    %297 = arith.addf %293, %296 : vector<16x1xf32>
    %298 = math.rsqrt %297 : vector<16x1xf32>
    %299 = vector.broadcast %298 : vector<16x1xf32> to vector<16x32xf32>
    %300 = arith.mulf %295, %299 : vector<16x32xf32>
    %301 = vector.broadcast %281 : vector<1x32xf32> to vector<16x32xf32>
    %302 = arith.mulf %300, %301 : vector<16x32xf32>
    %303 = vector.broadcast %282 : vector<1x32xf32> to vector<16x32xf32>
    %304 = arith.addf %302, %303 : vector<16x32xf32>
    %305 = vector.extract_strided_slice %304 {offsets = [0, 0], sizes = [1, 32], strides = [1, 1]} : vector<16x32xf32> to vector<1x32xf32>
    %306 = vector.extract_strided_slice %304 {offsets = [8, 0], sizes = [1, 32], strides = [1, 1]} : vector<16x32xf32> to vector<1x32xf32>
    %307 = tpu.concatenate %305, %306 in 0 : vector<1x32xf32>, vector<1x32xf32> -> vector<2x32xf32>
    %c0_98 = arith.constant 0 : index
    %c0_99 = arith.constant 0 : index
    %308 = vector.load %arg7[%c0_98, %c0_99] : memref<32x34xbf16, #tpu.memory_space<vmem>>, vector<32x32xbf16>
    %309 = arith.truncf %307 : vector<2x32xf32> to vector<2x32xbf16>
    %cst_100 = arith.constant dense<0.000000e+00> : vector<2x32xf32>
    %310 = tpu.matmul %309, %308, %cst_100 {dimension_numbers = #tpu.dot_dimension_numbers<[1], [0], [0], [1], [0, 0, 1, 1], [], []>} : vector<2x32xbf16>, vector<32x32xbf16>, vector<2x32xf32> -> vector<2x32xf32>
    %c18 = arith.constant 18 : index
    %c0_101 = arith.constant 0 : index
    %311 = vector.load %arg8[%c18, %c0_101] : memref<20x96xf32, #tpu.memory_space<vmem>>, vector<1x32xf32>
    %312 = vector.broadcast %311 : vector<1x32xf32> to vector<2x32xf32>
    %313 = arith.addf %310, %312 : vector<2x32xf32>
    %314 = math.tanh %313 : vector<2x32xf32>
    %c0_102 = arith.constant 0 : index
    %c32 = arith.constant 32 : index
    %315 = vector.load %arg7[%c0_102, %c32] : memref<32x34xbf16, #tpu.memory_space<vmem>>, vector<32x2xbf16>
    %316 = arith.truncf %314 : vector<2x32xf32> to vector<2x32xbf16>
    %cst_103 = arith.constant dense<0.000000e+00> : vector<2x2xf32>
    %317 = tpu.matmul %316, %315, %cst_103 {dimension_numbers = #tpu.dot_dimension_numbers<[1], [0], [0], [1], [0, 0, 1, 1], [], []>} : vector<2x32xbf16>, vector<32x2xbf16>, vector<2x2xf32> -> vector<2x2xf32>
    %c19 = arith.constant 19 : index
    %c0_104 = arith.constant 0 : index
    %318 = vector.load %arg8[%c19, %c0_104] : memref<20x96xf32, #tpu.memory_space<vmem>>, vector<1x2xf32>
    %319 = vector.broadcast %318 : vector<1x2xf32> to vector<2x2xf32>
    %320 = arith.addf %317, %319 : vector<2x2xf32>
    %321 = vector.extract_strided_slice %0 {offsets = [0, 3], sizes = [2, 1], strides = [1, 1]} : vector<16x4xi32> to vector<2x1xi32>
    %cst_105 = arith.constant dense<0xFF800000> : vector<2xf32>
    %322 = vector.multi_reduction <maximumf>, %320, %cst_105 [1] : vector<2x2xf32> to vector<2xf32>
    %323 = vector.shape_cast %322 : vector<2xf32> to vector<2x1xf32>
    %324 = vector.broadcast %323 : vector<2x1xf32> to vector<2x2xf32>
    %325 = arith.subf %320, %324 : vector<2x2xf32>
    %326 = math.exp %325 : vector<2x2xf32>
    %cst_106 = arith.constant dense<0.000000e+00> : vector<2xf32>
    %327 = vector.multi_reduction <add>, %326, %cst_106 [1] : vector<2x2xf32> to vector<2xf32>
    %328 = vector.shape_cast %327 : vector<2xf32> to vector<2x1xf32>
    %329 = math.log %328 : vector<2x1xf32>
    %330 = arith.addf %329, %323 : vector<2x1xf32>
    %331 = tpu.iota {dimensions = array<i32: 1>} : vector<2x2xi32>
    %332 = vector.broadcast %321 : vector<2x1xi32> to vector<2x2xi32>
    %333 = arith.cmpi eq, %331, %332 : vector<2x2xi32>
    %334 = arith.extui %333 : vector<2x2xi1> to vector<2x2xi32>
    %335 = arith.sitofp %334 : vector<2x2xi32> to vector<2x2xf32>
    %336 = arith.mulf %320, %335 : vector<2x2xf32>
    %cst_107 = arith.constant dense<0.000000e+00> : vector<2xf32>
    %337 = vector.multi_reduction <add>, %336, %cst_107 [1] : vector<2x2xf32> to vector<2xf32>
    %338 = vector.shape_cast %337 : vector<2xf32> to vector<2x1xf32>
    %339 = arith.subf %330, %338 : vector<2x1xf32>
    %cst_108 = arith.constant dense<0.000000e+00> : vector<1xf32>
    %340 = vector.multi_reduction <add>, %339, %cst_108 [0] : vector<2x1xf32> to vector<1xf32>
    %341 = vector.shape_cast %340 : vector<1xf32> to vector<1x1xf32>
    %cst_109 = arith.constant 5.000000e-01 : f32
    %342 = vector.broadcast %cst_109 : f32 to vector<1x1xf32>
    %343 = arith.mulf %341, %342 : vector<1x1xf32>
    %c0_110 = arith.constant 0 : index
    %c0_111 = arith.constant 0 : index
    %344 = vector.load %arg9[%c0_110, %c0_111] : memref<1x1xf32, #tpu.memory_space<vmem>>, vector<1x1xf32>
    tpu.vector_store %arg9[%c0_110, %c0_111], %343 {strides = array<i32>} : memref<1x1xf32, #tpu.memory_space<vmem>>, vector<1x1xf32>,
    %345 = vector.broadcast %323 : vector<2x1xf32> to vector<2x2xf32>
    %346 = arith.cmpf oeq, %320, %345 : vector<2x2xf32>
    %c2_i32 = arith.constant 2 : i32
    %347 = vector.broadcast %c2_i32 : i32 to vector<2x2xi32>
    %348 = arith.select %346, %331, %347 : vector<2x2xi1>, vector<2x2xi32>
    %cst_112 = arith.constant dense<2147483647> : vector<2xi32>
    %349 = vector.multi_reduction <minsi>, %348, %cst_112 [1] : vector<2x2xi32> to vector<2xi32>
    %350 = vector.shape_cast %349 : vector<2xi32> to vector<2x1xi32>
    %c0_113 = arith.constant 0 : index
    %c0_114 = arith.constant 0 : index
    %351 = vector.load %arg10[%c0_113, %c0_114] : memref<2x1xi32, #tpu.memory_space<vmem>>, vector<2x1xi32>
    tpu.vector_store %arg10[%c0_113, %c0_114], %350 {strides = array<i32>} : memref<2x1xi32, #tpu.memory_space<vmem>>, vector<2x1xi32>,
    return
  }
}

</mosaic_0001>

<llo_original>
// kernel: _lambda_.1
$region0: #{_lambda_.1}
  #allocation0 [shape = 'u32[]', space=smem, size = 0x4, offset = 0x4, fixed_abs, tag = 'smem constant byte address 0x4 - core index']
  #allocation1 [shape = 'u32[144,128]{1,0:T(1,128)}', space=vmem, size = 0x12000, scoped, tag = 'internal scratch']
  %s0 = inlined_call_operand.vmem [shape: s32[16,4], index: 0, kind: input, shape index: {}]
  %s1 = inlined_call_operand.vmem [shape: f32[2,16,16], index: 1, kind: input, shape index: {}]
  %s2 = inlined_call_operand.vmem [shape: bf16[144,32], index: 2, kind: input, shape index: {}]
  %s3 = inlined_call_operand.vmem [shape: bf16[2,32,96], index: 3, kind: input, shape index: {}]
  %s4 = inlined_call_operand.hbm [shape: bf16[2,32,32], index: 4, kind: input, shape index: {}]
  %s5 = inlined_call_operand.hbm [shape: bf16[2,32,64], index: 5, kind: input, shape index: {}]
  %s6 = inlined_call_operand.vmem [shape: bf16[2,64,32], index: 6, kind: input, shape index: {}]
  %s7 = inlined_call_operand.hbm [shape: bf16[32,34], index: 7, kind: input, shape index: {}]
  %s8 = inlined_call_operand.hbm [shape: f32[20,96], index: 8, kind: input, shape index: {}]
  %s9 = inlined_call_operand.hbm [shape: f32[1,1], index: 9, kind: output, shape index: {0}]
  %s10 = inlined_call_operand.vmem [shape: s32[2,1], index: 10, kind: output, shape index: {1}]
  %11 = xla_tuple %s9, %s10
  %s12 = sld [smem:[#allocation0]]
  $region70: #{_lambda_.1} parent=0
    _
  %s14 = ssub.s32 1, %s12
  %s15 = scalar_select 0, %s14, %s12
  $region1: #{_lambda_.1} parent=0
    #allocation2 [shape = 'u8[16384]{0}', space=vmem, size = 0x4000, scoped, tag = 'input window, operand 4, single buffered']
    #allocation3 [shape = 's32[1]{0}', space=sflag, size = 0x4, scoped, tag = 'scoped memory for _lambda_.1']
    #allocation4 [shape = 's32[1]{0}', space=sflag, size = 0x4, scoped, tag = 'scoped memory for _lambda_.1']
    #allocation5 [shape = 'u8[16384]{0}', space=vmem, size = 0x4000, scoped, tag = 'input window, operand 5, single buffered']
    #allocation6 [shape = 's32[1]{0}', space=sflag, size = 0x4, scoped, tag = 'scoped memory for _lambda_.1']
    #allocation7 [shape = 'u8[8192]{0}', space=vmem, size = 0x2000, scoped, tag = 'input window, operand 7, single buffered']
    #allocation8 [shape = 'u8[12288]{0}', space=vmem, size = 0x3000, scoped, tag = 'input window, operand 8, single buffered']
    #allocation9 [shape = 's32[1]{0}', space=sflag, size = 0x4, scoped, tag = 'scoped memory for _lambda_.1']
    #allocation10 [shape = 'u8[512]{0}', space=vmem, size = 0x400, scoped, tag = 'output window, operand 0, single buffered']
    %16 = vsyncpa [#allocation3], 0
    %17 = vsyncpa [#allocation6], 0
    %18 = vsyncpa [#allocation9], 0
    %19 = vsyncpa [#allocation4], 0
    // Predicated region
    $region2: #{_lambda_.1} parent=1 // pred_check
      _
    $region3: #{_lambda_.1} parent=1 // pred_check_branch
      %21 = sbr.rel (0) target = $region5
    $region4: #{_lambda_.1} parent=1 // pred_region
      _
    $region5: #{_lambda_.1} parent=1 // pred_fallthru
      _
    // Predicated region
    $region6: #{_lambda_.1} parent=1 // pred_check
      _
    $region7: #{_lambda_.1} parent=1 // pred_check_branch
      %23 = sbr.rel (0) target = $region9
    $region8: #{_lambda_.1} parent=1 // pred_region
      _
    $region9: #{_lambda_.1} parent=1 // pred_fallthru
      _
    // Predicated region
    $region10: #{_lambda_.1} parent=1 // pred_check
      _
    $region11: #{_lambda_.1} parent=1 // pred_check_branch
      %25 = sbr.rel (0) target = $region13
    $region12: #{_lambda_.1} parent=1 // pred_region
      _
    $region13: #{_lambda_.1} parent=1 // pred_fallthru
      _
    // Predicated region
    $region14: #{_lambda_.1} parent=1 // pred_check
      _
    $region15: #{_lambda_.1} parent=1 // pred_check_branch
      %27 = sbr.rel (0) target = $region17
    $region16: #{_lambda_.1} parent=1 // pred_region
      _
    $region17: #{_lambda_.1} parent=1 // pred_fallthru
      _
    // Predicated region
    $region18: #{_lambda_.1} parent=1 // pred_check
      _
    $region19: #{_lambda_.1} parent=1 // pred_check_branch
      %29 = sbr.rel (0) target = $region21
    $region20: #{_lambda_.1} parent=1 // pred_region
      %s31 = ssub.s32 512, 512
      %32 = vsyncadd [#allocation3], %s31
      %s33 = sshll.u32 [#allocation2], 4
      %s34 = int_to_ptr.vmem [resolvable:$true] %s33
      %39 = dma.hbm_to_vmem [thread:$0]  %s4, 512, %s34, [#allocation3], 64, 64, 4
    $region21: #{_lambda_.1} parent=1 // pred_fallthru
      _
    // Predicated region
    $region22: #{_lambda_.1} parent=1 // pred_check
      _
    $region23: #{_lambda_.1} parent=1 // pred_check_branch
      %41 = sbr.rel (0) target = $region25
    $region24: #{_lambda_.1} parent=1 // pred_region
      %s43 = ssub.s32 512, 512
      %44 = vsyncadd [#allocation6], %s43
      %s45 = sshll.u32 [#allocation5], 4
      %s46 = int_to_ptr.vmem [resolvable:$true] %s45
      %51 = dma.hbm_to_vmem [thread:$0]  %s5, 512, %s46, [#allocation6], 64, 64, 4
    $region25: #{_lambda_.1} parent=1 // pred_fallthru
      _
    // Predicated region
    $region26: #{_lambda_.1} parent=1 // pred_check
      _
    $region27: #{_lambda_.1} parent=1 // pred_check_branch
      %53 = sbr.rel (0) target = $region29
    $region28: #{_lambda_.1} parent=1 // pred_region
      _
    $region29: #{_lambda_.1} parent=1 // pred_fallthru
      _
    // Predicated region
    $region30: #{_lambda_.1} parent=1 // pred_check
      _
    $region31: #{_lambda_.1} parent=1 // pred_check_branch
      %55 = sbr.rel (0) target = $region33
    $region32: #{_lambda_.1} parent=1 // pred_region
      %s57 = ssub.s32 256, 256
      %58 = vsyncadd [#allocation6], %s57
      %s59 = sshll.u32 [#allocation7], 4
      %s60 = int_to_ptr.vmem [resolvable:$true] %s59
      %65 = dma.hbm_to_vmem [thread:$0]  %s7, 256, %s60, [#allocation6], 64, 64, 4
    $region33: #{_lambda_.1} parent=1 // pred_fallthru
      _
    // Predicated region
    $region34: #{_lambda_.1} parent=1 // pred_check
      _
    $region35: #{_lambda_.1} parent=1 // pred_check_branch
      %67 = sbr.rel (0) target = $region37
    $region36: #{_lambda_.1} parent=1 // pred_region
      %s69 = ssub.s32 384, 384
      %70 = vsyncadd [#allocation9], %s69
      %s71 = sshll.u32 [#allocation8], 4
      %s72 = int_to_ptr.vmem [resolvable:$true] %s71
      %77 = dma.hbm_to_vmem [thread:$0]  %s8, 384, %s72, [#allocation9], 128, 128, 8
    $region37: #{_lambda_.1} parent=1 // pred_fallthru
      _
    // Predicated region
    $region38: #{_lambda_.1} parent=1 // pred_check
      _
    $region39: #{_lambda_.1} parent=1 // pred_check_branch
      %79 = sbr.rel (0) target = $region41
    $region40: #{_lambda_.1} parent=1 // pred_region
      %80 = dma.done [#allocation3], 512
    $region41: #{_lambda_.1} parent=1 // pred_fallthru
      _
    // Predicated region
    $region42: #{_lambda_.1} parent=1 // pred_check
      _
    $region43: #{_lambda_.1} parent=1 // pred_check_branch
      %82 = sbr.rel (0) target = $region45
    $region44: #{_lambda_.1} parent=1 // pred_region
      %83 = dma.done [#allocation6], 512
    $region45: #{_lambda_.1} parent=1 // pred_fallthru
      _
    // Predicated region
    $region46: #{_lambda_.1} parent=1 // pred_check
      _
    $region47: #{_lambda_.1} parent=1 // pred_check_branch
      %85 = sbr.rel (0) target = $region49
    $region48: #{_lambda_.1} parent=1 // pred_region
      %86 = dma.done [#allocation6], 256
    $region49: #{_lambda_.1} parent=1 // pred_fallthru
      _
    // Predicated region
    $region50: #{_lambda_.1} parent=1 // pred_check
      _
    $region51: #{_lambda_.1} parent=1 // pred_check_branch
      %88 = sbr.rel (0) target = $region53
    $region52: #{_lambda_.1} parent=1 // pred_region
      %89 = dma.done [#allocation9], 384
    $region53: #{_lambda_.1} parent=1 // pred_fallthru
      _
    %v91 = vld [vmem:[%s0] sm:$0xff]
    %v92 = vld [vmem:[%s0 + $0x8] sm:$0xff]
    %v93 = vlaneseq
    %v94 = vand.u32 %v93, 127
    %v95 = vadd.s32 %v94, 128
    %96 = vset.pattern.permute.xlu0 0
    %97 = vperm.xlu0 %96, %v91
    %v98 = vpop.permute.xlu0 %97
    %99 = vset.pattern.permute.xlu0 0
    %100 = vperm.xlu0 %99, %v92
    %v101 = vpop.permute.xlu0 %100
    %vm102 = vcmp.eq.s32.totalorder %v94, %v98
    %vm103 = vcmp.eq.s32.totalorder %v95, %v98
    %vm104 = vcmp.eq.s32.totalorder %v94, %v101
    %vm105 = vcmp.eq.s32.totalorder %v95, %v101
    %106 = vset.pattern.permute.xlu0 1
    %107 = vperm.xlu0 %106, %v91
    %v108 = vpop.permute.xlu0 %107
    %109 = vset.pattern.permute.xlu0 1
    %110 = vperm.xlu0 %109, %v92
    %v111 = vpop.permute.xlu0 %110
    %vm112 = vcmp.eq.s32.totalorder %v94, %v108
    %vm113 = vcmp.eq.s32.totalorder %v95, %v108
    %vm114 = vcmp.eq.s32.totalorder %v94, %v111
    %vm115 = vcmp.eq.s32.totalorder %v95, %v111
    %vm116 = vmor %vm102, %vm112
    %vm117 = vmor %vm103, %vm113
    %vm118 = vmor %vm104, %vm114
    %vm119 = vmor %vm105, %vm115
    %120 = vset.pattern.permute.xlu0 2
    %121 = vperm.xlu0 %120, %v91
    %v122 = vpop.permute.xlu0 %121
    %123 = vset.pattern.permute.xlu0 2
    %124 = vperm.xlu0 %123, %v92
    %v125 = vpop.permute.xlu0 %124
    %vm126 = vcmp.eq.s32.totalorder %v94, %v122
    %vm127 = vcmp.eq.s32.totalorder %v95, %v122
    %vm128 = vcmp.eq.s32.totalorder %v94, %v125
    %vm129 = vcmp.eq.s32.totalorder %v95, %v125
    %vm130 = vmor %vm116, %vm126
    %vm131 = vmor %vm117, %vm127
    %vm132 = vmor %vm118, %vm128
    %vm133 = vmor %vm119, %vm129
    %v134 = vsel %vm130, 1, 0
    %v135 = vsel %vm131, 1, 0
    %v136 = vsel %vm132, 1, 0
    %v137 = vsel %vm133, 1, 0
    %v138 = vcvt.s32.f32 %v134
    %v139 = vcvt.s32.f32 %v135
    %v140 = vcvt.s32.f32 %v136
    %v141 = vcvt.s32.f32 %v137
    %v142 = vpack.c.bf16 %v140, %v138
    %v143 = vpack.c.bf16 %v141, %v139
    %v144 = vld [vmem:[%s2] sm:$0xf]
    %v145 = vld [vmem:[%s2 + $0x4] sm:$0xf]
    %v146 = vld [vmem:[%s2 + $0x8] sm:$0xf]
    %v147 = vld [vmem:[%s2 + $0xc] sm:$0xf]
    %v148 = vld [vmem:[%s2 + $0x10] sm:$0xf]
    %v149 = vld [vmem:[%s2 + $0x14] sm:$0xf]
    %v150 = vld [vmem:[%s2 + $0x18] sm:$0xf]
    %v151 = vld [vmem:[%s2 + $0x1c] sm:$0xf]
    %v152 = vld [vmem:[%s2 + $0x20] sm:$0xf]
    %v153 = vld [vmem:[%s2 + $0x24] sm:$0xf]
    %v154 = vld [vmem:[%s2 + $0x28] sm:$0xf]
    %v155 = vld [vmem:[%s2 + $0x2c] sm:$0xf]
    %v156 = vld [vmem:[%s2 + $0x30] sm:$0xf]
    %v157 = vld [vmem:[%s2 + $0x34] sm:$0xf]
    %v158 = vld [vmem:[%s2 + $0x38] sm:$0xf]
    %v159 = vld [vmem:[%s2 + $0x3c] sm:$0xf]
    %v160 = vld [vmem:[%s2 + $0x40] sm:$0xf]
    %v161 = vld [vmem:[%s2 + $0x44] sm:$0xf]
    %v180 = vunpack.c.l.b16 %v144
    %v181 = vunpack.c.l.b16 %v145
    %v182 = vunpack.c.l.b16 %v146
    %v183 = vunpack.c.l.b16 %v147
    %v184 = vunpack.c.l.b16 %v148
    %v185 = vunpack.c.l.b16 %v149
    %v186 = vunpack.c.l.b16 %v150
    %v187 = vunpack.c.l.b16 %v151
    %v188 = vunpack.c.l.b16 %v152
    %v189 = vunpack.c.l.b16 %v153
    %v190 = vunpack.c.l.b16 %v154
    %v191 = vunpack.c.l.b16 %v155
    %v192 = vunpack.c.l.b16 %v156
    %v193 = vunpack.c.l.b16 %v157
    %v194 = vunpack.c.l.b16 %v158
    %v195 = vunpack.c.l.b16 %v159
    %v196 = vunpack.c.l.b16 %v160
    %v197 = vunpack.c.l.b16 %v161
    %v198 = vpack.c.b16 %v181, %v180
    %v199 = vpack.c.b16 %v183, %v182
    %v200 = vpack.c.b16 %v185, %v184
    %v201 = vpack.c.b16 %v187, %v186
    %v202 = vpack.c.b16 %v189, %v188
    %v203 = vpack.c.b16 %v191, %v190
    %v204 = vpack.c.b16 %v193, %v192
    %v205 = vpack.c.b16 %v195, %v194
    %v206 = vpack.c.b16 %v197, %v196
    %vm216 = vcmask 130048
    %v218 = vsel %vm216, %v143, 0
    %220 = vmatprep.subr.bf16.mxu0 0
    %221 = vmatpush1.bf16.msra.mxu0 %v198
    %222 = vmatprep.subr.bf16.mxu0 0
    %223 = vmatpush1.bf16.msra.mxu0 %v199
    %224 = vmatprep.subr.bf16.mxu0 0
    %225 = vmatpush1.bf16.msra.mxu0 %v200
    %226 = vmatprep.subr.bf16.mxu0 0
    %227 = vmatpush1.bf16.msra.mxu0 %v201
    %228 = vmatprep.subr.bf16.mxu0 0
    %229 = vmatpush1.bf16.msra.mxu0 %v202
    %230 = vmatprep.subr.bf16.mxu0 0
    %231 = vmatpush1.bf16.msra.mxu0 %v203
    %232 = vmatprep.subr.bf16.mxu0 0
    %233 = vmatpush1.bf16.msra.mxu0 %v204
    %234 = vmatprep.subr.bf16.mxu0 0
    %235 = vmatpush1.bf16.msra.mxu0 %v205
    %236 = vmatprep.subr.bf16.mxu0 0
    %237 = vmatpush1.bf16.msra.mxu0 %v206
    %238 = vmatprep.subr.bf16.mxu0 0
    %239 = vmatpush1.bf16.msra.mxu0 0
    %240 = vmatprep.subr.bf16.mxu0 0
    %241 = vmatpush1.bf16.msra.mxu0 0
    %242 = vmatprep.subr.bf16.mxu0 0
    %243 = vmatpush1.bf16.msra.mxu0 0
    %244 = vmatprep.subr.bf16.mxu0 0
    %245 = vmatpush1.bf16.msra.mxu0 0
    %246 = vmatprep.subr.bf16.mxu0 0
    %247 = vmatpush1.bf16.msra.mxu0 0
    %248 = vmatprep.subr.bf16.mxu0 0
    %249 = vmatpush1.bf16.msra.mxu0 0
    %250 = vmatprep.subr.bf16.mxu0 0
    %251 = vmatpush1.bf16.msra.mxu0 0
    %252 = vmatprep.mubr.bf16.mxu0 %v218
    %253 = vmatmul.mubr.bf16.gmra.mrb[0].mxu0 %v142
    %v254 = vpop.f32.mrb[0].mxu0
    %v255 = vadd.f32 0.0, %v254
    %v256 = vpop.f32.mrb[0].mxu0
    %v257 = vpop.f32.mrb[0].mxu0
    %v258 = vadd.f32 0.0, %v257
    %v259 = vpop.f32.mrb[0].mxu0
    %260 = vdwg.mxu0
    %v261 = vld [vmem:[#allocation8] sm:$0x1]
    %v262 = vld [vmem:[#allocation8 + $0x1] sm:$0x1]
    %vm263 = vcmask 261120
    %v264 = vsel %vm263, %v255, 0.0
    %265 = vadd.xlane.f32.xlu0 %v264
    %v266 = vpop.xlane.xlu0 %265
    %v267 = vsel %vm263, %v258, 0.0
    %268 = vadd.xlane.f32.xlu0 %v267
    %v269 = vpop.xlane.xlu0 %268
    %v270 = vrcp.pop 32.0
    %v271 = vmul.f32 %v266, %v270
    %v272 = vmul.f32 %v269, %v270
    %v273 = vsub.f32 %v255, %v271
    %v274 = vsub.f32 %v258, %v272
    %v275 = vmul.f32 %v273, %v273
    %v276 = vmul.f32 %v274, %v274
    %v277 = vsel %vm263, %v275, 0.0
    %278 = vadd.xlane.f32.xlu0 %v277
    %v279 = vpop.xlane.xlu0 %278
    %v280 = vsel %vm263, %v276, 0.0
    %281 = vadd.xlane.f32.xlu0 %v280
    %v282 = vpop.xlane.xlu0 %281
    %v283 = vmul.f32 %v279, %v270
    %v284 = vmul.f32 %v282, %v270
    %v285 = vadd.f32 %v283, 1e-12
    %v286 = vadd.f32 %v284, 1e-12
    %v287 = vrsqrt.pop %v285
    %v288 = vrsqrt.pop %v286
    %v289 = vmul.f32 %v273, %v287
    %v290 = vmul.f32 %v274, %v288
    %v291 = vlaneseq
    %v292 = vshrl.u32 %v291, 7
    %v293 = vsub.s32 0, %v292
    %v294 = vrot.slane %v261, %v293
    %v295 = vmul.f32 %v289, %v294
    %v296 = vmul.f32 %v290, %v294
    %v297 = vlaneseq
    %v298 = vshrl.u32 %v297, 7
    %v299 = vsub.s32 0, %v298
    %v300 = vrot.slane %v262, %v299
    %v301 = vadd.f32 %v295, %v300
    %v302 = vadd.f32 %v296, %v300
    %v303 = vld [vmem:[%s1] sm:$0xff]
    %v304 = vld [vmem:[%s1 + $0x8] sm:$0xff]
    %v305 = vld [vmem:[%s1 + $0x10] sm:$0xff]
    %v306 = vld [vmem:[%s1 + $0x18] sm:$0xff]
    %v307 = vld [vmem:[%s3] sm:$0xf]
    %v308 = vld [vmem:[%s3 + $0x4] sm:$0xf]
    %v309 = vld [vmem:[%s3 + $0x8] sm:$0xf]
    %v310 = vld [vmem:[%s3 + $0xc] sm:$0xf]
    %v311 = vpack.c.bf16 %v302, %v301
    %v312 = vld [vmem:[#allocation8 + $0x2] sm:$0x1]
    %v313 = vlaneseq
    %v314 = vshrl.u32 %v313, 7
    %v315 = vsub.s32 0, %v314
    %v316 = vrot.slane %v312, %v315
    %v321 = vunpack.c.l.b16 %v307
    %v322 = vunpack.c.l.b16 %v308
    %v323 = vunpack.c.l.b16 %v309
    %v324 = vunpack.c.l.b16 %v310
    %v325 = vpack.c.b16 %v322, %v321
    %v326 = vpack.c.b16 %v324, %v323
    %v330 = vsel %vm263, %v311, 0
    %332 = vmatprep.subr.bf16.mxu0 0
    %333 = vmatpush1.bf16.msra.mxu0 %v325
    %334 = vmatprep.subr.bf16.mxu0 0
    %335 = vmatpush1.bf16.msra.mxu0 %v326
    %336 = vmatprep.subr.bf16.mxu0 0
    %337 = vmatpush1.bf16.msra.mxu0 0
    %338 = vmatprep.subr.bf16.mxu0 0
    %339 = vmatpush1.bf16.msra.mxu0 0
    %340 = vmatprep.subr.bf16.mxu0 0
    %341 = vmatpush1.bf16.msra.mxu0 0
    %342 = vmatprep.subr.bf16.mxu0 0
    %343 = vmatpush1.bf16.msra.mxu0 0
    %344 = vmatprep.subr.bf16.mxu0 0
    %345 = vmatpush1.bf16.msra.mxu0 0
    %346 = vmatprep.subr.bf16.mxu0 0
    %347 = vmatpush1.bf16.msra.mxu0 0
    %348 = vmatprep.subr.bf16.mxu0 0
    %349 = vmatpush1.bf16.msra.mxu0 0
    %350 = vmatprep.subr.bf16.mxu0 0
    %351 = vmatpush1.bf16.msra.mxu0 0
    %352 = vmatprep.subr.bf16.mxu0 0
    %353 = vmatpush1.bf16.msra.mxu0 0
    %354 = vmatprep.subr.bf16.mxu0 0
    %355 = vmatpush1.bf16.msra.mxu0 0
    %356 = vmatprep.subr.bf16.mxu0 0
    %357 = vmatpush1.bf16.msra.mxu0 0
    %358 = vmatprep.subr.bf16.mxu0 0
    %359 = vmatpush1.bf16.msra.mxu0 0
    %360 = vmatprep.subr.bf16.mxu0 0
    %361 = vmatpush1.bf16.msra.mxu0 0
    %362 = vmatprep.subr.bf16.mxu0 0
    %363 = vmatpush1.bf16.msra.mxu0 0
    %364 = vmatprep.mubr.bf16.mxu0 0
    %365 = vmatmul.mubr.bf16.gmra.mrb[0].mxu0 %v330
    %v366 = vpop.f32.mrb[0].mxu0
    %v367 = vadd.f32 %v316, %v366
    %v368 = vpop.f32.mrb[0].mxu0
    %v369 = vpop.f32.mrb[0].mxu0
    %v370 = vadd.f32 %v316, %v369
    %v371 = vpop.f32.mrb[0].mxu0
    %372 = vdwg.mxu0
    %375 = vrot.lane.b32.xlu0 %v367, 112
    %v376 = vpop.permute.xlu0 %375
    %377 = vrot.lane.b32.xlu0 %v370, 112
    %v378 = vpop.permute.xlu0 %377
    %v381 = vpack.c.bf16 %v370, %v367
    %v382 = vpack.c.bf16 %v378, %v376
    %384 = vrot.lane.b32.xlu0 %v381, 96
    %v385 = vpop.permute.xlu0 %384
    %v387 = vsel %vm216, %v381, 0
    %v390 = vsel %vm216, %v385, 0
    %392 = vmatprep.subr.bf16.mxu0 0
    %393 = vmatpush1.bf16.xpose.msra.mxu0 %v390
    %394 = vmatprep.subr.bf16.mxu0 0
    %395 = vmatpush1.bf16.xpose.msra.mxu0 0
    %396 = vmatprep.subr.bf16.mxu0 0
    %397 = vmatpush1.bf16.xpose.msra.mxu0 0
    %398 = vmatprep.subr.bf16.mxu0 0
    %399 = vmatpush1.bf16.xpose.msra.mxu0 0
    %400 = vmatprep.subr.bf16.mxu0 0
    %401 = vmatpush1.bf16.xpose.msra.mxu0 0
    %402 = vmatprep.subr.bf16.mxu0 0
    %403 = vmatpush1.bf16.xpose.msra.mxu0 0
    %404 = vmatprep.subr.bf16.mxu0 0
    %405 = vmatpush1.bf16.xpose.msra.mxu0 0
    %406 = vmatprep.subr.bf16.mxu0 0
    %407 = vmatpush1.bf16.xpose.msra.mxu0 0
    %408 = vmatprep.subr.bf16.mxu0 0
    %409 = vmatpush1.bf16.xpose.msra.mxu0 0
    %410 = vmatprep.subr.bf16.mxu0 0
    %411 = vmatpush1.bf16.xpose.msra.mxu0 0
    %412 = vmatprep.subr.bf16.mxu0 0
    %413 = vmatpush1.bf16.xpose.msra.mxu0 0
    %414 = vmatprep.subr.bf16.mxu0 0
    %415 = vmatpush1.bf16.xpose.msra.mxu0 0
    %416 = vmatprep.subr.bf16.mxu0 0
    %417 = vmatpush1.bf16.xpose.msra.mxu0 0
    %418 = vmatprep.subr.bf16.mxu0 0
    %419 = vmatpush1.bf16.xpose.msra.mxu0 0
    %420 = vmatprep.subr.bf16.mxu0 0
    %421 = vmatpush1.bf16.xpose.msra.mxu0 0
    %422 = vmatprep.subr.bf16.mxu0 0
    %423 = vmatpush1.bf16.xpose.msra.mxu0 0
    %424 = vmatprep.mubr.bf16.mxu0 0
    %425 = vmatmul.mubr.bf16.gmra.mrb[0].mxu0 %v387
    %v426 = vpop.f32.mrb[0].mxu0
    %v427 = vadd.f32 %v303, %v426
    %v428 = vpop.f32.mrb[0].mxu0
    %v429 = vpop.f32.mrb[0].mxu0
    %v430 = vadd.f32 %v304, %v429
    %v431 = vpop.f32.mrb[0].mxu0
    %432 = vdwg.mxu0
    %434 = vrot.lane.b32.xlu0 %v382, 96
    %v435 = vpop.permute.xlu0 %434
    %v437 = vsel %vm216, %v382, 0
    %v440 = vsel %vm216, %v435, 0
    %442 = vmatprep.subr.bf16.mxu0 0
    %443 = vmatpush1.bf16.xpose.msra.mxu0 %v440
    %444 = vmatprep.subr.bf16.mxu0 0
    %445 = vmatpush1.bf16.xpose.msra.mxu0 0
    %446 = vmatprep.subr.bf16.mxu0 0
    %447 = vmatpush1.bf16.xpose.msra.mxu0 0
    %448 = vmatprep.subr.bf16.mxu0 0
    %449 = vmatpush1.bf16.xpose.msra.mxu0 0
    %450 = vmatprep.subr.bf16.mxu0 0
    %451 = vmatpush1.bf16.xpose.msra.mxu0 0
    %452 = vmatprep.subr.bf16.mxu0 0
    %453 = vmatpush1.bf16.xpose.msra.mxu0 0
    %454 = vmatprep.subr.bf16.mxu0 0
    %455 = vmatpush1.bf16.xpose.msra.mxu0 0
    %456 = vmatprep.subr.bf16.mxu0 0
    %457 = vmatpush1.bf16.xpose.msra.mxu0 0
    %458 = vmatprep.subr.bf16.mxu0 0
    %459 = vmatpush1.bf16.xpose.msra.mxu0 0
    %460 = vmatprep.subr.bf16.mxu0 0
    %461 = vmatpush1.bf16.xpose.msra.mxu0 0
    %462 = vmatprep.subr.bf16.mxu0 0
    %463 = vmatpush1.bf16.xpose.msra.mxu0 0
    %464 = vmatprep.subr.bf16.mxu0 0
    %465 = vmatpush1.bf16.xpose.msra.mxu0 0
    %466 = vmatprep.subr.bf16.mxu0 0
    %467 = vmatpush1.bf16.xpose.msra.mxu0 0
    %468 = vmatprep.subr.bf16.mxu0 0
    %469 = vmatpush1.bf16.xpose.msra.mxu0 0
    %470 = vmatprep.subr.bf16.mxu0 0
    %471 = vmatpush1.bf16.xpose.msra.mxu0 0
    %472 = vmatprep.subr.bf16.mxu0 0
    %473 = vmatpush1.bf16.xpose.msra.mxu0 0
    %474 = vmatprep.mubr.bf16.mxu0 0
    %475 = vmatmul.mubr.bf16.gmra.mrb[0].mxu0 %v437
    %v476 = vpop.f32.mrb[0].mxu0
    %v477 = vadd.f32 %v305, %v476
    %v478 = vpop.f32.mrb[0].mxu0
    %v479 = vpop.f32.mrb[0].mxu0
    %v480 = vadd.f32 %v306, %v479
    %v481 = vpop.f32.mrb[0].mxu0
    %482 = vdwg.mxu0
    %v483 = vsel %vm216, %v427, -inf
    %484 = vmax.xlane.f32.xlu0 %v483
    %v485 = vpop.xlane.xlu0 %484
    %v486 = vsel %vm216, %v430, -inf
    %487 = vmax.xlane.f32.xlu0 %v486
    %v488 = vpop.xlane.xlu0 %487
    %v489 = vsel %vm216, %v477, -inf
    %490 = vmax.xlane.f32.xlu0 %v489
    %v491 = vpop.xlane.xlu0 %490
    %v492 = vsel %vm216, %v480, -inf
    %493 = vmax.xlane.f32.xlu0 %v492
    %v494 = vpop.xlane.xlu0 %493
    %v495 = vsub.f32 %v427, %v485
    %v496 = vsub.f32 %v430, %v488
    %v497 = vsub.f32 %v477, %v491
    %v498 = vsub.f32 %v480, %v494
    %v499 = vmul.f32 %v495, 1.442695
    %v500 = vpow.pop %v499
    %v501 = vmul.f32 %v496, 1.442695
    %v502 = vpow.pop %v501
    %v503 = vmul.f32 %v497, 1.442695
    %v504 = vpow.pop %v503
    %v505 = vmul.f32 %v498, 1.442695
    %v506 = vpow.pop %v505
    %v507 = vsel %vm216, %v500, 0.0
    %508 = vadd.xlane.f32.xlu0 %v507
    %v509 = vpop.xlane.xlu0 %508
    %v510 = vsel %vm216, %v502, 0.0
    %511 = vadd.xlane.f32.xlu0 %v510
    %v512 = vpop.xlane.xlu0 %511
    %v513 = vsel %vm216, %v504, 0.0
    %514 = vadd.xlane.f32.xlu0 %v513
    %v515 = vpop.xlane.xlu0 %514
    %v516 = vsel %vm216, %v506, 0.0
    %517 = vadd.xlane.f32.xlu0 %v516
    %v518 = vpop.xlane.xlu0 %517
    %v519 = vrcp.pop %v509
    %v520 = vrcp.pop %v512
    %v521 = vrcp.pop %v515
    %v522 = vrcp.pop %v518
    %v523 = vmul.f32 %v500, %v519
    %v524 = vmul.f32 %v502, %v520
    %v525 = vmul.f32 %v504, %v521
    %v526 = vmul.f32 %v506, %v522
    %v527 = vpack.c.bf16 %v524, %v523
    %v528 = vpack.c.bf16 %v526, %v525
    %529 = vrot.lane.b32.xlu0 %v381, 64
    %v530 = vpop.permute.xlu0 %529
    %v533 = vsel %vm216, %v527, 0
    %535 = vmatprep.subr.bf16.mxu0 0
    %536 = vmatpush1.bf16.msra.mxu0 %v530
    %537 = vmatprep.subr.bf16.mxu0 0
    %538 = vmatpush1.bf16.msra.mxu0 0
    %539 = vmatprep.subr.bf16.mxu0 0
    %540 = vmatpush1.bf16.msra.mxu0 0
    %541 = vmatprep.subr.bf16.mxu0 0
    %542 = vmatpush1.bf16.msra.mxu0 0
    %543 = vmatprep.subr.bf16.mxu0 0
    %544 = vmatpush1.bf16.msra.mxu0 0
    %545 = vmatprep.subr.bf16.mxu0 0
    %546 = vmatpush1.bf16.msra.mxu0 0
    %547 = vmatprep.subr.bf16.mxu0 0
    %548 = vmatpush1.bf16.msra.mxu0 0
    %549 = vmatprep.subr.bf16.mxu0 0
    %550 = vmatpush1.bf16.msra.mxu0 0
    %551 = vmatprep.subr.bf16.mxu0 0
    %552 = vmatpush1.bf16.msra.mxu0 0
    %553 = vmatprep.subr.bf16.mxu0 0
    %554 = vmatpush1.bf16.msra.mxu0 0
    %555 = vmatprep.subr.bf16.mxu0 0
    %556 = vmatpush1.bf16.msra.mxu0 0
    %557 = vmatprep.subr.bf16.mxu0 0
    %558 = vmatpush1.bf16.msra.mxu0 0
    %559 = vmatprep.subr.bf16.mxu0 0
    %560 = vmatpush1.bf16.msra.mxu0 0
    %561 = vmatprep.subr.bf16.mxu0 0
    %562 = vmatpush1.bf16.msra.mxu0 0
    %563 = vmatprep.subr.bf16.mxu0 0
    %564 = vmatpush1.bf16.msra.mxu0 0
    %565 = vmatprep.subr.bf16.mxu0 0
    %566 = vmatpush1.bf16.msra.mxu0 0
    %567 = vmatprep.mubr.bf16.mxu0 0
    %568 = vmatmul.mubr.bf16.gmra.mrb[0].mxu0 %v533
    %v569 = vpop.f32.mrb[0].mxu0
    %v570 = vadd.f32 0.0, %v569
    %v571 = vpop.f32.mrb[0].mxu0
    %v572 = vpop.f32.mrb[0].mxu0
    %v573 = vadd.f32 0.0, %v572
    %v574 = vpop.f32.mrb[0].mxu0
    %575 = vdwg.mxu0
    %576 = vrot.lane.b32.xlu0 %v382, 64
    %v577 = vpop.permute.xlu0 %576
    %v580 = vsel %vm216, %v528, 0
    %582 = vmatprep.subr.bf16.mxu0 0
    %583 = vmatpush1.bf16.msra.mxu0 %v577
    %584 = vmatprep.subr.bf16.mxu0 0
    %585 = vmatpush1.bf16.msra.mxu0 0
    %586 = vmatprep.subr.bf16.mxu0 0
    %587 = vmatpush1.bf16.msra.mxu0 0
    %588 = vmatprep.subr.bf16.mxu0 0
    %589 = vmatpush1.bf16.msra.mxu0 0
    %590 = vmatprep.subr.bf16.mxu0 0
    %591 = vmatpush1.bf16.msra.mxu0 0
    %592 = vmatprep.subr.bf16.mxu0 0
    %593 = vmatpush1.bf16.msra.mxu0 0
    %594 = vmatprep.subr.bf16.mxu0 0
    %595 = vmatpush1.bf16.msra.mxu0 0
    %596 = vmatprep.subr.bf16.mxu0 0
    %597 = vmatpush1.bf16.msra.mxu0 0
    %598 = vmatprep.subr.bf16.mxu0 0
    %599 = vmatpush1.bf16.msra.mxu0 0
    %600 = vmatprep.subr.bf16.mxu0 0
    %601 = vmatpush1.bf16.msra.mxu0 0
    %602 = vmatprep.subr.bf16.mxu0 0
    %603 = vmatpush1.bf16.msra.mxu0 0
    %604 = vmatprep.subr.bf16.mxu0 0
    %605 = vmatpush1.bf16.msra.mxu0 0
    %606 = vmatprep.subr.bf16.mxu0 0
    %607 = vmatpush1.bf16.msra.mxu0 0
    %608 = vmatprep.subr.bf16.mxu0 0
    %609 = vmatpush1.bf16.msra.mxu0 0
    %610 = vmatprep.subr.bf16.mxu0 0
    %611 = vmatpush1.bf16.msra.mxu0 0
    %612 = vmatprep.subr.bf16.mxu0 0
    %613 = vmatpush1.bf16.msra.mxu0 0
    %614 = vmatprep.mubr.bf16.mxu0 0
    %615 = vmatmul.mubr.bf16.gmra.mrb[0].mxu0 %v580
    %v616 = vpop.f32.mrb[0].mxu0
    %v617 = vadd.f32 0.0, %v616
    %v618 = vpop.f32.mrb[0].mxu0
    %v619 = vpop.f32.mrb[0].mxu0
    %v620 = vadd.f32 0.0, %v619
    %v621 = vpop.f32.mrb[0].mxu0
    %622 = vdwg.mxu0
    %625 = vrot.lane.b32.xlu0 %v617, 16
    %v626 = vpop.permute.xlu0 %625
    %627 = vrot.lane.b32.xlu0 %v620, 16
    %v628 = vpop.permute.xlu0 %627
    %v631 = vsel %vm216, %v570, %v626
    %v632 = vsel %vm216, %v573, %v628
    %v633 = vld [vmem:[#allocation2] sm:$0xf]
    %v634 = vld [vmem:[#allocation2 + $0x4] sm:$0xf]
    %v635 = vld [vmem:[#allocation2 + $0x8] sm:$0xf]
    %v636 = vld [vmem:[#allocation2 + $0xc] sm:$0xf]
    %v637 = vpack.c.bf16 %v632, %v631
    %v638 = vld [vmem:[#allocation8 + $0x3] sm:$0x1]
    %v639 = vlaneseq
    %v640 = vshrl.u32 %v639, 7
    %v641 = vsub.s32 0, %v640
    %v642 = vrot.slane %v638, %v641
    %v647 = vunpack.c.l.b16 %v633
    %v648 = vunpack.c.l.b16 %v634
    %v649 = vunpack.c.l.b16 %v635
    %v650 = vunpack.c.l.b16 %v636
    %v651 = vpack.c.b16 %v648, %v647
    %v652 = vpack.c.b16 %v650, %v649
    %v656 = vsel %vm263, %v637, 0
    %658 = vmatprep.subr.bf16.mxu0 0
    %659 = vmatpush1.bf16.msra.mxu0 %v651
    %660 = vmatprep.subr.bf16.mxu0 0
    %661 = vmatpush1.bf16.msra.mxu0 %v652
    %662 = vmatprep.subr.bf16.mxu0 0
    %663 = vmatpush1.bf16.msra.mxu0 0
    %664 = vmatprep.subr.bf16.mxu0 0
    %665 = vmatpush1.bf16.msra.mxu0 0
    %666 = vmatprep.subr.bf16.mxu0 0
    %667 = vmatpush1.bf16.msra.mxu0 0
    %668 = vmatprep.subr.bf16.mxu0 0
    %669 = vmatpush1.bf16.msra.mxu0 0
    %670 = vmatprep.subr.bf16.mxu0 0
    %671 = vmatpush1.bf16.msra.mxu0 0
    %672 = vmatprep.subr.bf16.mxu0 0
    %673 = vmatpush1.bf16.msra.mxu0 0
    %674 = vmatprep.subr.bf16.mxu0 0
    %675 = vmatpush1.bf16.msra.mxu0 0
    %676 = vmatprep.subr.bf16.mxu0 0
    %677 = vmatpush1.bf16.msra.mxu0 0
    %678 = vmatprep.subr.bf16.mxu0 0
    %679 = vmatpush1.bf16.msra.mxu0 0
    %680 = vmatprep.subr.bf16.mxu0 0
    %681 = vmatpush1.bf16.msra.mxu0 0
    %682 = vmatprep.subr.bf16.mxu0 0
    %683 = vmatpush1.bf16.msra.mxu0 0
    %684 = vmatprep.subr.bf16.mxu0 0
    %685 = vmatpush1.bf16.msra.mxu0 0
    %686 = vmatprep.subr.bf16.mxu0 0
    %687 = vmatpush1.bf16.msra.mxu0 0
    %688 = vmatprep.subr.bf16.mxu0 0
    %689 = vmatpush1.bf16.msra.mxu0 0
    %690 = vmatprep.mubr.bf16.mxu0 0
    %691 = vmatmul.mubr.bf16.gmra.mrb[0].mxu0 %v656
    %v692 = vpop.f32.mrb[0].mxu0
    %v693 = vadd.f32 %v642, %v692
    %v694 = vpop.f32.mrb[0].mxu0
    %v695 = vpop.f32.mrb[0].mxu0
    %v696 = vadd.f32 %v642, %v695
    %v697 = vpop.f32.mrb[0].mxu0
    %698 = vdwg.mxu0
    %v699 = vadd.f32 %v301, %v693
    %v700 = vadd.f32 %v302, %v696
    %v701 = vld [vmem:[#allocation8 + $0x4] sm:$0x1]
    %v702 = vld [vmem:[#allocation8 + $0x5] sm:$0x1]
    %v703 = vsel %vm263, %v699, 0.0
    %704 = vadd.xlane.f32.xlu0 %v703
    %v705 = vpop.xlane.xlu0 %704
    %v706 = vsel %vm263, %v700, 0.0
    %707 = vadd.xlane.f32.xlu0 %v706
    %v708 = vpop.xlane.xlu0 %707
    %v709 = vmul.f32 %v705, %v270
    %v710 = vmul.f32 %v708, %v270
    %v711 = vsub.f32 %v699, %v709
    %v712 = vsub.f32 %v700, %v710
    %v713 = vmul.f32 %v711, %v711
    %v714 = vmul.f32 %v712, %v712
    %v715 = vsel %vm263, %v713, 0.0
    %716 = vadd.xlane.f32.xlu0 %v715
    %v717 = vpop.xlane.xlu0 %716
    %v718 = vsel %vm263, %v714, 0.0
    %719 = vadd.xlane.f32.xlu0 %v718
    %v720 = vpop.xlane.xlu0 %719
    %v721 = vmul.f32 %v717, %v270
    %v722 = vmul.f32 %v720, %v270
    %v723 = vadd.f32 %v721, 1e-12
    %v724 = vadd.f32 %v722, 1e-12
    %v725 = vrsqrt.pop %v723
    %v726 = vrsqrt.pop %v724
    %v727 = vmul.f32 %v711, %v725
    %v728 = vmul.f32 %v712, %v726
    %v729 = vlaneseq
    %v730 = vshrl.u32 %v729, 7
    %v731 = vsub.s32 0, %v730
    %v732 = vrot.slane %v701, %v731
    %v733 = vmul.f32 %v727, %v732
    %v734 = vmul.f32 %v728, %v732
    %v735 = vlaneseq
    %v736 = vshrl.u32 %v735, 7
    %v737 = vsub.s32 0, %v736
    %v738 = vrot.slane %v702, %v737
    %v739 = vadd.f32 %v733, %v738
    %v740 = vadd.f32 %v734, %v738
    %v741 = vld [vmem:[#allocation5] sm:$0xf]
    %v742 = vld [vmem:[#allocation5 + $0x4] sm:$0xf]
    %v743 = vld [vmem:[#allocation5 + $0x8] sm:$0xf]
    %v744 = vld [vmem:[#allocation5 + $0xc] sm:$0xf]
    %v745 = vpack.c.bf16 %v740, %v739
    %v746 = vld [vmem:[#allocation8 + $0x6] sm:$0x1]
    %v747 = vlaneseq
    %v748 = vshrl.u32 %v747, 7
    %v749 = vsub.s32 0, %v748
    %v750 = vrot.slane %v746, %v749
    %v755 = vunpack.c.l.b16 %v741
    %v756 = vunpack.c.l.b16 %v742
    %v757 = vunpack.c.l.b16 %v743
    %v758 = vunpack.c.l.b16 %v744
    %v759 = vpack.c.b16 %v756, %v755
    %v760 = vpack.c.b16 %v758, %v757
    %v764 = vsel %vm263, %v745, 0
    %766 = vmatprep.subr.bf16.mxu0 0
    %767 = vmatpush1.bf16.msra.mxu0 %v759
    %768 = vmatprep.subr.bf16.mxu0 0
    %769 = vmatpush1.bf16.msra.mxu0 %v760
    %770 = vmatprep.subr.bf16.mxu0 0
    %771 = vmatpush1.bf16.msra.mxu0 0
    %772 = vmatprep.subr.bf16.mxu0 0
    %773 = vmatpush1.bf16.msra.mxu0 0
    %774 = vmatprep.subr.bf16.mxu0 0
    %775 = vmatpush1.bf16.msra.mxu0 0
    %776 = vmatprep.subr.bf16.mxu0 0
    %777 = vmatpush1.bf16.msra.mxu0 0
    %778 = vmatprep.subr.bf16.mxu0 0
    %779 = vmatpush1.bf16.msra.mxu0 0
    %780 = vmatprep.subr.bf16.mxu0 0
    %781 = vmatpush1.bf16.msra.mxu0 0
    %782 = vmatprep.subr.bf16.mxu0 0
    %783 = vmatpush1.bf16.msra.mxu0 0
    %784 = vmatprep.subr.bf16.mxu0 0
    %785 = vmatpush1.bf16.msra.mxu0 0
    %786 = vmatprep.subr.bf16.mxu0 0
    %787 = vmatpush1.bf16.msra.mxu0 0
    %788 = vmatprep.subr.bf16.mxu0 0
    %789 = vmatpush1.bf16.msra.mxu0 0
    %790 = vmatprep.subr.bf16.mxu0 0
    %791 = vmatpush1.bf16.msra.mxu0 0
    %792 = vmatprep.subr.bf16.mxu0 0
    %793 = vmatpush1.bf16.msra.mxu0 0
    %794 = vmatprep.subr.bf16.mxu0 0
    %795 = vmatpush1.bf16.msra.mxu0 0
    %796 = vmatprep.subr.bf16.mxu0 0
    %797 = vmatpush1.bf16.msra.mxu0 0
    %798 = vmatprep.mubr.bf16.mxu0 0
    %799 = vmatmul.mubr.bf16.gmra.mrb[0].mxu0 %v764
    %v800 = vpop.f32.mrb[0].mxu0
    %v801 = vadd.f32 %v750, %v800
    %v802 = vpop.f32.mrb[0].mxu0
    %v803 = vpop.f32.mrb[0].mxu0
    %v804 = vadd.f32 %v750, %v803
    %v805 = vpop.f32.mrb[0].mxu0
    %806 = vdwg.mxu0
    %v807 = vmul.f32 %v801, %v801
    %v808 = vmul.f32 %v804, %v804
    %v809 = vmul.f32 %v801, %v807
    %v810 = vmul.f32 %v804, %v808
    %v811 = vmul.f32 %v809, 0.044715
    %v812 = vmul.f32 %v810, 0.044715
    %v813 = vadd.f32 %v801, %v811
    %v814 = vadd.f32 %v804, %v812
    %v815 = vmul.f32 %v813, 0.7978846
    %v816 = vmul.f32 %v814, 0.7978846
    %v817 = vtanh.pop %v815
    %v818 = vtanh.pop %v816
    %v819 = vadd.f32 %v817, 1.0
    %v820 = vadd.f32 %v818, 1.0
    %v821 = vmul.f32 %v819, 0.5
    %v822 = vmul.f32 %v820, 0.5
    %v823 = vmul.f32 %v801, %v821
    %v824 = vmul.f32 %v804, %v822
    %v825 = vld [vmem:[%s6] sm:$0xf]
    %v826 = vld [vmem:[%s6 + $0x4] sm:$0xf]
    %v827 = vld [vmem:[%s6 + $0x8] sm:$0xf]
    %v828 = vld [vmem:[%s6 + $0xc] sm:$0xf]
    %v829 = vld [vmem:[%s6 + $0x10] sm:$0xf]
    %v830 = vld [vmem:[%s6 + $0x14] sm:$0xf]
    %v831 = vld [vmem:[%s6 + $0x18] sm:$0xf]
    %v832 = vld [vmem:[%s6 + $0x1c] sm:$0xf]
    %v833 = vpack.c.bf16 %v824, %v823
    %v834 = vld [vmem:[#allocation8 + $0x7] sm:$0x1]
    %v835 = vlaneseq
    %v836 = vshrl.u32 %v835, 7
    %v837 = vsub.s32 0, %v836
    %v838 = vrot.slane %v834, %v837
    %v847 = vunpack.c.l.b16 %v825
    %v848 = vunpack.c.l.b16 %v826
    %v849 = vunpack.c.l.b16 %v827
    %v850 = vunpack.c.l.b16 %v828
    %v851 = vunpack.c.l.b16 %v829
    %v852 = vunpack.c.l.b16 %v830
    %v853 = vunpack.c.l.b16 %v831
    %v854 = vunpack.c.l.b16 %v832
    %v855 = vpack.c.b16 %v848, %v847
    %v856 = vpack.c.b16 %v850, %v849
    %v857 = vpack.c.b16 %v852, %v851
    %v858 = vpack.c.b16 %v854, %v853
    %vm863 = vcmask 523264
    %v865 = vsel %vm863, %v833, 0
    %867 = vmatprep.subr.bf16.mxu0 0
    %868 = vmatpush1.bf16.msra.mxu0 %v855
    %869 = vmatprep.subr.bf16.mxu0 0
    %870 = vmatpush1.bf16.msra.mxu0 %v856
    %871 = vmatprep.subr.bf16.mxu0 0
    %872 = vmatpush1.bf16.msra.mxu0 %v857
    %873 = vmatprep.subr.bf16.mxu0 0
    %874 = vmatpush1.bf16.msra.mxu0 %v858
    %875 = vmatprep.subr.bf16.mxu0 0
    %876 = vmatpush1.bf16.msra.mxu0 0
    %877 = vmatprep.subr.bf16.mxu0 0
    %878 = vmatpush1.bf16.msra.mxu0 0
    %879 = vmatprep.subr.bf16.mxu0 0
    %880 = vmatpush1.bf16.msra.mxu0 0
    %881 = vmatprep.subr.bf16.mxu0 0
    %882 = vmatpush1.bf16.msra.mxu0 0
    %883 = vmatprep.subr.bf16.mxu0 0
    %884 = vmatpush1.bf16.msra.mxu0 0
    %885 = vmatprep.subr.bf16.mxu0 0
    %886 = vmatpush1.bf16.msra.mxu0 0
    %887 = vmatprep.subr.bf16.mxu0 0
    %888 = vmatpush1.bf16.msra.mxu0 0
    %889 = vmatprep.subr.bf16.mxu0 0
    %890 = vmatpush1.bf16.msra.mxu0 0
    %891 = vmatprep.subr.bf16.mxu0 0
    %892 = vmatpush1.bf16.msra.mxu0 0
    %893 = vmatprep.subr.bf16.mxu0 0
    %894 = vmatpush1.bf16.msra.mxu0 0
    %895 = vmatprep.subr.bf16.mxu0 0
    %896 = vmatpush1.bf16.msra.mxu0 0
    %897 = vmatprep.subr.bf16.mxu0 0
    %898 = vmatpush1.bf16.msra.mxu0 0
    %899 = vmatprep.mubr.bf16.mxu0 0
    %900 = vmatmul.mubr.bf16.gmra.mrb[0].mxu0 %v865
    %v901 = vpop.f32.mrb[0].mxu0
    %v902 = vadd.f32 %v838, %v901
    %v903 = vpop.f32.mrb[0].mxu0
    %v904 = vpop.f32.mrb[0].mxu0
    %v905 = vadd.f32 %v838, %v904
    %v906 = vpop.f32.mrb[0].mxu0
    %907 = vdwg.mxu0
    %v908 = vadd.f32 %v739, %v902
    %v909 = vadd.f32 %v740, %v905
    %v910 = vld [vmem:[#allocation8 + $0x8] sm:$0x1]
    %v911 = vld [vmem:[#allocation8 + $0x9] sm:$0x1]
    %v912 = vsel %vm263, %v908, 0.0
    %913 = vadd.xlane.f32.xlu0 %v912
    %v914 = vpop.xlane.xlu0 %913
    %v915 = vsel %vm263, %v909, 0.0
    %916 = vadd.xlane.f32.xlu0 %v915
    %v917 = vpop.xlane.xlu0 %916
    %v918 = vmul.f32 %v914, %v270
    %v919 = vmul.f32 %v917, %v270
    %v920 = vsub.f32 %v908, %v918
    %v921 = vsub.f32 %v909, %v919
    %v922 = vmul.f32 %v920, %v920
    %v923 = vmul.f32 %v921, %v921
    %v924 = vsel %vm263, %v922, 0.0
    %925 = vadd.xlane.f32.xlu0 %v924
    %v926 = vpop.xlane.xlu0 %925
    %v927 = vsel %vm263, %v923, 0.0
    %928 = vadd.xlane.f32.xlu0 %v927
    %v929 = vpop.xlane.xlu0 %928
    %v930 = vmul.f32 %v926, %v270
    %v931 = vmul.f32 %v929, %v270
    %v932 = vadd.f32 %v930, 1e-12
    %v933 = vadd.f32 %v931, 1e-12
    %v934 = vrsqrt.pop %v932
    %v935 = vrsqrt.pop %v933
    %v936 = vmul.f32 %v920, %v934
    %v937 = vmul.f32 %v921, %v935
    %v938 = vlaneseq
    %v939 = vshrl.u32 %v938, 7
    %v940 = vsub.s32 0, %v939
    %v941 = vrot.slane %v910, %v940
    %v942 = vmul.f32 %v936, %v941
    %v943 = vmul.f32 %v937, %v941
    %v944 = vlaneseq
    %v945 = vshrl.u32 %v944, 7
    %v946 = vsub.s32 0, %v945
    %v947 = vrot.slane %v911, %v946
    %v948 = vadd.f32 %v942, %v947
    %v949 = vadd.f32 %v943, %v947
    %s950 = scalar_lea.vmem %s3, 16
    %v951 = vld [vmem:[%s950] sm:$0xf]
    %v952 = vld [vmem:[%s950 + $0x4] sm:$0xf]
    %v953 = vld [vmem:[%s950 + $0x8] sm:$0xf]
    %v954 = vld [vmem:[%s950 + $0xc] sm:$0xf]
    %v955 = vpack.c.bf16 %v949, %v948
    %v956 = vld [vmem:[#allocation8 + $0xa] sm:$0x1]
    %v957 = vlaneseq
    %v958 = vshrl.u32 %v957, 7
    %v959 = vsub.s32 0, %v958
    %v960 = vrot.slane %v956, %v959
    %v965 = vunpack.c.l.b16 %v951
    %v966 = vunpack.c.l.b16 %v952
    %v967 = vunpack.c.l.b16 %v953
    %v968 = vunpack.c.l.b16 %v954
    %v969 = vpack.c.b16 %v966, %v965
    %v970 = vpack.c.b16 %v968, %v967
    %v974 = vsel %vm263, %v955, 0
    %976 = vmatprep.subr.bf16.mxu0 0
    %977 = vmatpush1.bf16.msra.mxu0 %v969
    %978 = vmatprep.subr.bf16.mxu0 0
    %979 = vmatpush1.bf16.msra.mxu0 %v970
    %980 = vmatprep.subr.bf16.mxu0 0
    %981 = vmatpush1.bf16.msra.mxu0 0
    %982 = vmatprep.subr.bf16.mxu0 0
    %983 = vmatpush1.bf16.msra.mxu0 0
    %984 = vmatprep.subr.bf16.mxu0 0
    %985 = vmatpush1.bf16.msra.mxu0 0
    %986 = vmatprep.subr.bf16.mxu0 0
    %987 = vmatpush1.bf16.msra.mxu0 0
    %988 = vmatprep.subr.bf16.mxu0 0
    %989 = vmatpush1.bf16.msra.mxu0 0
    %990 = vmatprep.subr.bf16.mxu0 0
    %991 = vmatpush1.bf16.msra.mxu0 0
    %992 = vmatprep.subr.bf16.mxu0 0
    %993 = vmatpush1.bf16.msra.mxu0 0
    %994 = vmatprep.subr.bf16.mxu0 0
    %995 = vmatpush1.bf16.msra.mxu0 0
    %996 = vmatprep.subr.bf16.mxu0 0
    %997 = vmatpush1.bf16.msra.mxu0 0
    %998 = vmatprep.subr.bf16.mxu0 0
    %999 = vmatpush1.bf16.msra.mxu0 0
    %1000 = vmatprep.subr.bf16.mxu0 0
    %1001 = vmatpush1.bf16.msra.mxu0 0
    %1002 = vmatprep.subr.bf16.mxu0 0
    %1003 = vmatpush1.bf16.msra.mxu0 0
    %1004 = vmatprep.subr.bf16.mxu0 0
    %1005 = vmatpush1.bf16.msra.mxu0 0
    %1006 = vmatprep.subr.bf16.mxu0 0
    %1007 = vmatpush1.bf16.msra.mxu0 0
    %1008 = vmatprep.mubr.bf16.mxu0 0
    %1009 = vmatmul.mubr.bf16.gmra.mrb[0].mxu0 %v974
    %v1010 = vpop.f32.mrb[0].mxu0
    %v1011 = vadd.f32 %v960, %v1010
    %v1012 = vpop.f32.mrb[0].mxu0
    %v1013 = vpop.f32.mrb[0].mxu0
    %v1014 = vadd.f32 %v960, %v1013
    %v1015 = vpop.f32.mrb[0].mxu0
    %1016 = vdwg.mxu0
    %1019 = vrot.lane.b32.xlu0 %v1011, 112
    %v1020 = vpop.permute.xlu0 %1019
    %1021 = vrot.lane.b32.xlu0 %v1014, 112
    %v1022 = vpop.permute.xlu0 %1021
    %v1025 = vpack.c.bf16 %v1014, %v1011
    %v1026 = vpack.c.bf16 %v1022, %v1020
    %1028 = vrot.lane.b32.xlu0 %v1025, 96
    %v1029 = vpop.permute.xlu0 %1028
    %v1031 = vsel %vm216, %v1025, 0
    %v1034 = vsel %vm216, %v1029, 0
    %1036 = vmatprep.subr.bf16.mxu0 0
    %1037 = vmatpush1.bf16.xpose.msra.mxu0 %v1034
    %1038 = vmatprep.subr.bf16.mxu0 0
    %1039 = vmatpush1.bf16.xpose.msra.mxu0 0
    %1040 = vmatprep.subr.bf16.mxu0 0
    %1041 = vmatpush1.bf16.xpose.msra.mxu0 0
    %1042 = vmatprep.subr.bf16.mxu0 0
    %1043 = vmatpush1.bf16.xpose.msra.mxu0 0
    %1044 = vmatprep.subr.bf16.mxu0 0
    %1045 = vmatpush1.bf16.xpose.msra.mxu0 0
    %1046 = vmatprep.subr.bf16.mxu0 0
    %1047 = vmatpush1.bf16.xpose.msra.mxu0 0
    %1048 = vmatprep.subr.bf16.mxu0 0
    %1049 = vmatpush1.bf16.xpose.msra.mxu0 0
    %1050 = vmatprep.subr.bf16.mxu0 0
    %1051 = vmatpush1.bf16.xpose.msra.mxu0 0
    %1052 = vmatprep.subr.bf16.mxu0 0
    %1053 = vmatpush1.bf16.xpose.msra.mxu0 0
    %1054 = vmatprep.subr.bf16.mxu0 0
    %1055 = vmatpush1.bf16.xpose.msra.mxu0 0
    %1056 = vmatprep.subr.bf16.mxu0 0
    %1057 = vmatpush1.bf16.xpose.msra.mxu0 0
    %1058 = vmatprep.subr.bf16.mxu0 0
    %1059 = vmatpush1.bf16.xpose.msra.mxu0 0
    %1060 = vmatprep.subr.bf16.mxu0 0
    %1061 = vmatpush1.bf16.xpose.msra.mxu0 0
    %1062 = vmatprep.subr.bf16.mxu0 0
    %1063 = vmatpush1.bf16.xpose.msra.mxu0 0
    %1064 = vmatprep.subr.bf16.mxu0 0
    %1065 = vmatpush1.bf16.xpose.msra.mxu0 0
    %1066 = vmatprep.subr.bf16.mxu0 0
    %1067 = vmatpush1.bf16.xpose.msra.mxu0 0
    %1068 = vmatprep.mubr.bf16.mxu0 0
    %1069 = vmatmul.mubr.bf16.gmra.mrb[0].mxu0 %v1031
    %v1070 = vpop.f32.mrb[0].mxu0
    %v1071 = vadd.f32 %v303, %v1070
    %v1072 = vpop.f32.mrb[0].mxu0
    %v1073 = vpop.f32.mrb[0].mxu0
    %v1074 = vadd.f32 %v304, %v1073
    %v1075 = vpop.f32.mrb[0].mxu0
    %1076 = vdwg.mxu0
    %1078 = vrot.lane.b32.xlu0 %v1026, 96
    %v1079 = vpop.permute.xlu0 %1078
    %v1081 = vsel %vm216, %v1026, 0
    %v1084 = vsel %vm216, %v1079, 0
    %1086 = vmatprep.subr.bf16.mxu0 0
    %1087 = vmatpush1.bf16.xpose.msra.mxu0 %v1084
    %1088 = vmatprep.subr.bf16.mxu0 0
    %1089 = vmatpush1.bf16.xpose.msra.mxu0 0
    %1090 = vmatprep.subr.bf16.mxu0 0
    %1091 = vmatpush1.bf16.xpose.msra.mxu0 0
    %1092 = vmatprep.subr.bf16.mxu0 0
    %1093 = vmatpush1.bf16.xpose.msra.mxu0 0
    %1094 = vmatprep.subr.bf16.mxu0 0
    %1095 = vmatpush1.bf16.xpose.msra.mxu0 0
    %1096 = vmatprep.subr.bf16.mxu0 0
    %1097 = vmatpush1.bf16.xpose.msra.mxu0 0
    %1098 = vmatprep.subr.bf16.mxu0 0
    %1099 = vmatpush1.bf16.xpose.msra.mxu0 0
    %1100 = vmatprep.subr.bf16.mxu0 0
    %1101 = vmatpush1.bf16.xpose.msra.mxu0 0
    %1102 = vmatprep.subr.bf16.mxu0 0
    %1103 = vmatpush1.bf16.xpose.msra.mxu0 0
    %1104 = vmatprep.subr.bf16.mxu0 0
    %1105 = vmatpush1.bf16.xpose.msra.mxu0 0
    %1106 = vmatprep.subr.bf16.mxu0 0
    %1107 = vmatpush1.bf16.xpose.msra.mxu0 0
    %1108 = vmatprep.subr.bf16.mxu0 0
    %1109 = vmatpush1.bf16.xpose.msra.mxu0 0
    %1110 = vmatprep.subr.bf16.mxu0 0
    %1111 = vmatpush1.bf16.xpose.msra.mxu0 0
    %1112 = vmatprep.subr.bf16.mxu0 0
    %1113 = vmatpush1.bf16.xpose.msra.mxu0 0
    %1114 = vmatprep.subr.bf16.mxu0 0
    %1115 = vmatpush1.bf16.xpose.msra.mxu0 0
    %1116 = vmatprep.subr.bf16.mxu0 0
    %1117 = vmatpush1.bf16.xpose.msra.mxu0 0
    %1118 = vmatprep.mubr.bf16.mxu0 0
    %1119 = vmatmul.mubr.bf16.gmra.mrb[0].mxu0 %v1081
    %v1120 = vpop.f32.mrb[0].mxu0
    %v1121 = vadd.f32 %v305, %v1120
    %v1122 = vpop.f32.mrb[0].mxu0
    %v1123 = vpop.f32.mrb[0].mxu0
    %v1124 = vadd.f32 %v306, %v1123
    %v1125 = vpop.f32.mrb[0].mxu0
    %1126 = vdwg.mxu0
    %v1127 = vsel %vm216, %v1071, -inf
    %1128 = vmax.xlane.f32.xlu0 %v1127
    %v1129 = vpop.xlane.xlu0 %1128
    %v1130 = vsel %vm216, %v1074, -inf
    %1131 = vmax.xlane.f32.xlu0 %v1130
    %v1132 = vpop.xlane.xlu0 %1131
    %v1133 = vsel %vm216, %v1121, -inf
    %1134 = vmax.xlane.f32.xlu0 %v1133
    %v1135 = vpop.xlane.xlu0 %1134
    %v1136 = vsel %vm216, %v1124, -inf
    %1137 = vmax.xlane.f32.xlu0 %v1136
    %v1138 = vpop.xlane.xlu0 %1137
    %v1139 = vsub.f32 %v1071, %v1129
    %v1140 = vsub.f32 %v1074, %v1132
    %v1141 = vsub.f32 %v1121, %v1135
    %v1142 = vsub.f32 %v1124, %v1138
    %v1143 = vmul.f32 %v1139, 1.442695
    %v1144 = vpow.pop %v1143
    %v1145 = vmul.f32 %v1140, 1.442695
    %v1146 = vpow.pop %v1145
    %v1147 = vmul.f32 %v1141, 1.442695
    %v1148 = vpow.pop %v1147
    %v1149 = vmul.f32 %v1142, 1.442695
    %v1150 = vpow.pop %v1149
    %v1151 = vsel %vm216, %v1144, 0.0
    %1152 = vadd.xlane.f32.xlu0 %v1151
    %v1153 = vpop.xlane.xlu0 %1152
    %v1154 = vsel %vm216, %v1146, 0.0
    %1155 = vadd.xlane.f32.xlu0 %v1154
    %v1156 = vpop.xlane.xlu0 %1155
    %v1157 = vsel %vm216, %v1148, 0.0
    %1158 = vadd.xlane.f32.xlu0 %v1157
    %v1159 = vpop.xlane.xlu0 %1158
    %v1160 = vsel %vm216, %v1150, 0.0
    %1161 = vadd.xlane.f32.xlu0 %v1160
    %v1162 = vpop.xlane.xlu0 %1161
    %v1163 = vrcp.pop %v1153
    %v1164 = vrcp.pop %v1156
    %v1165 = vrcp.pop %v1159
    %v1166 = vrcp.pop %v1162
    %v1167 = vmul.f32 %v1144, %v1163
    %v1168 = vmul.f32 %v1146, %v1164
    %v1169 = vmul.f32 %v1148, %v1165
    %v1170 = vmul.f32 %v1150, %v1166
    %v1171 = vpack.c.bf16 %v1168, %v1167
    %v1172 = vpack.c.bf16 %v1170, %v1169
    %1173 = vrot.lane.b32.xlu0 %v1025, 64
    %v1174 = vpop.permute.xlu0 %1173
    %v1177 = vsel %vm216, %v1171, 0
    %1179 = vmatprep.subr.bf16.mxu0 0
    %1180 = vmatpush1.bf16.msra.mxu0 %v1174
    %1181 = vmatprep.subr.bf16.mxu0 0
    %1182 = vmatpush1.bf16.msra.mxu0 0
    %1183 = vmatprep.subr.bf16.mxu0 0
    %1184 = vmatpush1.bf16.msra.mxu0 0
    %1185 = vmatprep.subr.bf16.mxu0 0
    %1186 = vmatpush1.bf16.msra.mxu0 0
    %1187 = vmatprep.subr.bf16.mxu0 0
    %1188 = vmatpush1.bf16.msra.mxu0 0
    %1189 = vmatprep.subr.bf16.mxu0 0
    %1190 = vmatpush1.bf16.msra.mxu0 0
    %1191 = vmatprep.subr.bf16.mxu0 0
    %1192 = vmatpush1.bf16.msra.mxu0 0
    %1193 = vmatprep.subr.bf16.mxu0 0
    %1194 = vmatpush1.bf16.msra.mxu0 0
    %1195 = vmatprep.subr.bf16.mxu0 0
    %1196 = vmatpush1.bf16.msra.mxu0 0
    %1197 = vmatprep.subr.bf16.mxu0 0
    %1198 = vmatpush1.bf16.msra.mxu0 0
    %1199 = vmatprep.subr.bf16.mxu0 0
    %1200 = vmatpush1.bf16.msra.mxu0 0
    %1201 = vmatprep.subr.bf16.mxu0 0
    %1202 = vmatpush1.bf16.msra.mxu0 0
    %1203 = vmatprep.subr.bf16.mxu0 0
    %1204 = vmatpush1.bf16.msra.mxu0 0
    %1205 = vmatprep.subr.bf16.mxu0 0
    %1206 = vmatpush1.bf16.msra.mxu0 0
    %1207 = vmatprep.subr.bf16.mxu0 0
    %1208 = vmatpush1.bf16.msra.mxu0 0
    %1209 = vmatprep.subr.bf16.mxu0 0
    %1210 = vmatpush1.bf16.msra.mxu0 0
    %1211 = vmatprep.mubr.bf16.mxu0 0
    %1212 = vmatmul.mubr.bf16.gmra.mrb[0].mxu0 %v1177
    %v1213 = vpop.f32.mrb[0].mxu0
    %v1214 = vadd.f32 0.0, %v1213
    %v1215 = vpop.f32.mrb[0].mxu0
    %v1216 = vpop.f32.mrb[0].mxu0
    %v1217 = vadd.f32 0.0, %v1216
    %v1218 = vpop.f32.mrb[0].mxu0
    %1219 = vdwg.mxu0
    %1220 = vrot.lane.b32.xlu0 %v1026, 64
    %v1221 = vpop.permute.xlu0 %1220
    %v1224 = vsel %vm216, %v1172, 0
    %1226 = vmatprep.subr.bf16.mxu0 0
    %1227 = vmatpush1.bf16.msra.mxu0 %v1221
    %1228 = vmatprep.subr.bf16.mxu0 0
    %1229 = vmatpush1.bf16.msra.mxu0 0
    %1230 = vmatprep.subr.bf16.mxu0 0
    %1231 = vmatpush1.bf16.msra.mxu0 0
    %1232 = vmatprep.subr.bf16.mxu0 0
    %1233 = vmatpush1.bf16.msra.mxu0 0
    %1234 = vmatprep.subr.bf16.mxu0 0
    %1235 = vmatpush1.bf16.msra.mxu0 0
    %1236 = vmatprep.subr.bf16.mxu0 0
    %1237 = vmatpush1.bf16.msra.mxu0 0
    %1238 = vmatprep.subr.bf16.mxu0 0
    %1239 = vmatpush1.bf16.msra.mxu0 0
    %1240 = vmatprep.subr.bf16.mxu0 0
    %1241 = vmatpush1.bf16.msra.mxu0 0
    %1242 = vmatprep.subr.bf16.mxu0 0
    %1243 = vmatpush1.bf16.msra.mxu0 0
    %1244 = vmatprep.subr.bf16.mxu0 0
    %1245 = vmatpush1.bf16.msra.mxu0 0
    %1246 = vmatprep.subr.bf16.mxu0 0
    %1247 = vmatpush1.bf16.msra.mxu0 0
    %1248 = vmatprep.subr.bf16.mxu0 0
    %1249 = vmatpush1.bf16.msra.mxu0 0
    %1250 = vmatprep.subr.bf16.mxu0 0
    %1251 = vmatpush1.bf16.msra.mxu0 0
    %1252 = vmatprep.subr.bf16.mxu0 0
    %1253 = vmatpush1.bf16.msra.mxu0 0
    %1254 = vmatprep.subr.bf16.mxu0 0
    %1255 = vmatpush1.bf16.msra.mxu0 0
    %1256 = vmatprep.subr.bf16.mxu0 0
    %1257 = vmatpush1.bf16.msra.mxu0 0
    %1258 = vmatprep.mubr.bf16.mxu0 0
    %1259 = vmatmul.mubr.bf16.gmra.mrb[0].mxu0 %v1224
    %v1260 = vpop.f32.mrb[0].mxu0
    %v1261 = vadd.f32 0.0, %v1260
    %v1262 = vpop.f32.mrb[0].mxu0
    %v1263 = vpop.f32.mrb[0].mxu0
    %v1264 = vadd.f32 0.0, %v1263
    %v1265 = vpop.f32.mrb[0].mxu0
    %1266 = vdwg.mxu0
    %1269 = vrot.lane.b32.xlu0 %v1261, 16
    %v1270 = vpop.permute.xlu0 %1269
    %1271 = vrot.lane.b32.xlu0 %v1264, 16
    %v1272 = vpop.permute.xlu0 %1271
    %v1275 = vsel %vm216, %v1214, %v1270
    %v1276 = vsel %vm216, %v1217, %v1272
    %s1277 = scalar_lea.vmem [#allocation2], 16
    %v1278 = vld [vmem:[%s1277] sm:$0xf]
    %v1279 = vld [vmem:[%s1277 + $0x4] sm:$0xf]
    %v1280 = vld [vmem:[%s1277 + $0x8] sm:$0xf]
    %v1281 = vld [vmem:[%s1277 + $0xc] sm:$0xf]
    %v1282 = vpack.c.bf16 %v1276, %v1275
    %v1283 = vld [vmem:[#allocation8 + $0xb] sm:$0x1]
    %v1284 = vlaneseq
    %v1285 = vshrl.u32 %v1284, 7
    %v1286 = vsub.s32 0, %v1285
    %v1287 = vrot.slane %v1283, %v1286
    %v1292 = vunpack.c.l.b16 %v1278
    %v1293 = vunpack.c.l.b16 %v1279
    %v1294 = vunpack.c.l.b16 %v1280
    %v1295 = vunpack.c.l.b16 %v1281
    %v1296 = vpack.c.b16 %v1293, %v1292
    %v1297 = vpack.c.b16 %v1295, %v1294
    %v1301 = vsel %vm263, %v1282, 0
    %1303 = vmatprep.subr.bf16.mxu0 0
    %1304 = vmatpush1.bf16.msra.mxu0 %v1296
    %1305 = vmatprep.subr.bf16.mxu0 0
    %1306 = vmatpush1.bf16.msra.mxu0 %v1297
    %1307 = vmatprep.subr.bf16.mxu0 0
    %1308 = vmatpush1.bf16.msra.mxu0 0
    %1309 = vmatprep.subr.bf16.mxu0 0
    %1310 = vmatpush1.bf16.msra.mxu0 0
    %1311 = vmatprep.subr.bf16.mxu0 0
    %1312 = vmatpush1.bf16.msra.mxu0 0
    %1313 = vmatprep.subr.bf16.mxu0 0
    %1314 = vmatpush1.bf16.msra.mxu0 0
    %1315 = vmatprep.subr.bf16.mxu0 0
    %1316 = vmatpush1.bf16.msra.mxu0 0
    %1317 = vmatprep.subr.bf16.mxu0 0
    %1318 = vmatpush1.bf16.msra.mxu0 0
    %1319 = vmatprep.subr.bf16.mxu0 0
    %1320 = vmatpush1.bf16.msra.mxu0 0
    %1321 = vmatprep.subr.bf16.mxu0 0
    %1322 = vmatpush1.bf16.msra.mxu0 0
    %1323 = vmatprep.subr.bf16.mxu0 0
    %1324 = vmatpush1.bf16.msra.mxu0 0
    %1325 = vmatprep.subr.bf16.mxu0 0
    %1326 = vmatpush1.bf16.msra.mxu0 0
    %1327 = vmatprep.subr.bf16.mxu0 0
    %1328 = vmatpush1.bf16.msra.mxu0 0
    %1329 = vmatprep.subr.bf16.mxu0 0
    %1330 = vmatpush1.bf16.msra.mxu0 0
    %1331 = vmatprep.subr.bf16.mxu0 0
    %1332 = vmatpush1.bf16.msra.mxu0 0
    %1333 = vmatprep.subr.bf16.mxu0 0
    %1334 = vmatpush1.bf16.msra.mxu0 0
    %1335 = vmatprep.mubr.bf16.mxu0 0
    %1336 = vmatmul.mubr.bf16.gmra.mrb[0].mxu0 %v1301
    %v1337 = vpop.f32.mrb[0].mxu0
    %v1338 = vadd.f32 %v1287, %v1337
    %v1339 = vpop.f32.mrb[0].mxu0
    %v1340 = vpop.f32.mrb[0].mxu0
    %v1341 = vadd.f32 %v1287, %v1340
    %v1342 = vpop.f32.mrb[0].mxu0
    %1343 = vdwg.mxu0
    %v1344 = vadd.f32 %v948, %v1338
    %v1345 = vadd.f32 %v949, %v1341
    %v1346 = vld [vmem:[#allocation8 + $0xc] sm:$0x1]
    %v1347 = vld [vmem:[#allocation8 + $0xd] sm:$0x1]
    %v1348 = vsel %vm263, %v1344, 0.0
    %1349 = vadd.xlane.f32.xlu0 %v1348
    %v1350 = vpop.xlane.xlu0 %1349
    %v1351 = vsel %vm263, %v1345, 0.0
    %1352 = vadd.xlane.f32.xlu0 %v1351
    %v1353 = vpop.xlane.xlu0 %1352
    %v1354 = vmul.f32 %v1350, %v270
    %v1355 = vmul.f32 %v1353, %v270
    %v1356 = vsub.f32 %v1344, %v1354
    %v1357 = vsub.f32 %v1345, %v1355
    %v1358 = vmul.f32 %v1356, %v1356
    %v1359 = vmul.f32 %v1357, %v1357
    %v1360 = vsel %vm263, %v1358, 0.0
    %1361 = vadd.xlane.f32.xlu0 %v1360
    %v1362 = vpop.xlane.xlu0 %1361
    %v1363 = vsel %vm263, %v1359, 0.0
    %1364 = vadd.xlane.f32.xlu0 %v1363
    %v1365 = vpop.xlane.xlu0 %1364
    %v1366 = vmul.f32 %v1362, %v270
    %v1367 = vmul.f32 %v1365, %v270
    %v1368 = vadd.f32 %v1366, 1e-12
    %v1369 = vadd.f32 %v1367, 1e-12
    %v1370 = vrsqrt.pop %v1368
    %v1371 = vrsqrt.pop %v1369
    %v1372 = vmul.f32 %v1356, %v1370
    %v1373 = vmul.f32 %v1357, %v1371
    %v1374 = vlaneseq
    %v1375 = vshrl.u32 %v1374, 7
    %v1376 = vsub.s32 0, %v1375
    %v1377 = vrot.slane %v1346, %v1376
    %v1378 = vmul.f32 %v1372, %v1377
    %v1379 = vmul.f32 %v1373, %v1377
    %v1380 = vlaneseq
    %v1381 = vshrl.u32 %v1380, 7
    %v1382 = vsub.s32 0, %v1381
    %v1383 = vrot.slane %v1347, %v1382
    %v1384 = vadd.f32 %v1378, %v1383
    %v1385 = vadd.f32 %v1379, %v1383
    %s1386 = scalar_lea.vmem [#allocation5], 16
    %v1387 = vld [vmem:[%s1386] sm:$0xf]
    %v1388 = vld [vmem:[%s1386 + $0x4] sm:$0xf]
    %v1389 = vld [vmem:[%s1386 + $0x8] sm:$0xf]
    %v1390 = vld [vmem:[%s1386 + $0xc] sm:$0xf]
    %v1391 = vpack.c.bf16 %v1385, %v1384
    %v1392 = vld [vmem:[#allocation8 + $0xe] sm:$0x1]
    %v1393 = vlaneseq
    %v1394 = vshrl.u32 %v1393, 7
    %v1395 = vsub.s32 0, %v1394
    %v1396 = vrot.slane %v1392, %v1395
    %v1401 = vunpack.c.l.b16 %v1387
    %v1402 = vunpack.c.l.b16 %v1388
    %v1403 = vunpack.c.l.b16 %v1389
    %v1404 = vunpack.c.l.b16 %v1390
    %v1405 = vpack.c.b16 %v1402, %v1401
    %v1406 = vpack.c.b16 %v1404, %v1403
    %v1410 = vsel %vm263, %v1391, 0
    %1412 = vmatprep.subr.bf16.mxu0 0
    %1413 = vmatpush1.bf16.msra.mxu0 %v1405
    %1414 = vmatprep.subr.bf16.mxu0 0
    %1415 = vmatpush1.bf16.msra.mxu0 %v1406
    %1416 = vmatprep.subr.bf16.mxu0 0
    %1417 = vmatpush1.bf16.msra.mxu0 0
    %1418 = vmatprep.subr.bf16.mxu0 0
    %1419 = vmatpush1.bf16.msra.mxu0 0
    %1420 = vmatprep.subr.bf16.mxu0 0
    %1421 = vmatpush1.bf16.msra.mxu0 0
    %1422 = vmatprep.subr.bf16.mxu0 0
    %1423 = vmatpush1.bf16.msra.mxu0 0
    %1424 = vmatprep.subr.bf16.mxu0 0
    %1425 = vmatpush1.bf16.msra.mxu0 0
    %1426 = vmatprep.subr.bf16.mxu0 0
    %1427 = vmatpush1.bf16.msra.mxu0 0
    %1428 = vmatprep.subr.bf16.mxu0 0
    %1429 = vmatpush1.bf16.msra.mxu0 0
    %1430 = vmatprep.subr.bf16.mxu0 0
    %1431 = vmatpush1.bf16.msra.mxu0 0
    %1432 = vmatprep.subr.bf16.mxu0 0
    %1433 = vmatpush1.bf16.msra.mxu0 0
    %1434 = vmatprep.subr.bf16.mxu0 0
    %1435 = vmatpush1.bf16.msra.mxu0 0
    %1436 = vmatprep.subr.bf16.mxu0 0
    %1437 = vmatpush1.bf16.msra.mxu0 0
    %1438 = vmatprep.subr.bf16.mxu0 0
    %1439 = vmatpush1.bf16.msra.mxu0 0
    %1440 = vmatprep.subr.bf16.mxu0 0
    %1441 = vmatpush1.bf16.msra.mxu0 0
    %1442 = vmatprep.subr.bf16.mxu0 0
    %1443 = vmatpush1.bf16.msra.mxu0 0
    %1444 = vmatprep.mubr.bf16.mxu0 0
    %1445 = vmatmul.mubr.bf16.gmra.mrb[0].mxu0 %v1410
    %v1446 = vpop.f32.mrb[0].mxu0
    %v1447 = vadd.f32 %v1396, %v1446
    %v1448 = vpop.f32.mrb[0].mxu0
    %v1449 = vpop.f32.mrb[0].mxu0
    %v1450 = vadd.f32 %v1396, %v1449
    %v1451 = vpop.f32.mrb[0].mxu0
    %1452 = vdwg.mxu0
    %v1453 = vmul.f32 %v1447, %v1447
    %v1454 = vmul.f32 %v1450, %v1450
    %v1455 = vmul.f32 %v1447, %v1453
    %v1456 = vmul.f32 %v1450, %v1454
    %v1457 = vmul.f32 %v1455, 0.044715
    %v1458 = vmul.f32 %v1456, 0.044715
    %v1459 = vadd.f32 %v1447, %v1457
    %v1460 = vadd.f32 %v1450, %v1458
    %v1461 = vmul.f32 %v1459, 0.7978846
    %v1462 = vmul.f32 %v1460, 0.7978846
    %v1463 = vtanh.pop %v1461
    %v1464 = vtanh.pop %v1462
    %v1465 = vadd.f32 %v1463, 1.0
    %v1466 = vadd.f32 %v1464, 1.0
    %v1467 = vmul.f32 %v1465, 0.5
    %v1468 = vmul.f32 %v1466, 0.5
    %v1469 = vmul.f32 %v1447, %v1467
    %v1470 = vmul.f32 %v1450, %v1468
    %s1471 = scalar_lea.vmem %s6, 32
    %v1472 = vld [vmem:[%s1471] sm:$0xf]
    %v1473 = vld [vmem:[%s1471 + $0x4] sm:$0xf]
    %v1474 = vld [vmem:[%s1471 + $0x8] sm:$0xf]
    %v1475 = vld [vmem:[%s1471 + $0xc] sm:$0xf]
    %v1476 = vld [vmem:[%s1471 + $0x10] sm:$0xf]
    %v1477 = vld [vmem:[%s1471 + $0x14] sm:$0xf]
    %v1478 = vld [vmem:[%s1471 + $0x18] sm:$0xf]
    %v1479 = vld [vmem:[%s1471 + $0x1c] sm:$0xf]
    %v1480 = vpack.c.bf16 %v1470, %v1469
    %v1481 = vld [vmem:[#allocation8 + $0xf] sm:$0x1]
    %v1482 = vlaneseq
    %v1483 = vshrl.u32 %v1482, 7
    %v1484 = vsub.s32 0, %v1483
    %v1485 = vrot.slane %v1481, %v1484
    %v1494 = vunpack.c.l.b16 %v1472
    %v1495 = vunpack.c.l.b16 %v1473
    %v1496 = vunpack.c.l.b16 %v1474
    %v1497 = vunpack.c.l.b16 %v1475
    %v1498 = vunpack.c.l.b16 %v1476
    %v1499 = vunpack.c.l.b16 %v1477
    %v1500 = vunpack.c.l.b16 %v1478
    %v1501 = vunpack.c.l.b16 %v1479
    %v1502 = vpack.c.b16 %v1495, %v1494
    %v1503 = vpack.c.b16 %v1497, %v1496
    %v1504 = vpack.c.b16 %v1499, %v1498
    %v1505 = vpack.c.b16 %v1501, %v1500
    %v1511 = vsel %vm863, %v1480, 0
    %1513 = vmatprep.subr.bf16.mxu0 0
    %1514 = vmatpush1.bf16.msra.mxu0 %v1502
    %1515 = vmatprep.subr.bf16.mxu0 0
    %1516 = vmatpush1.bf16.msra.mxu0 %v1503
    %1517 = vmatprep.subr.bf16.mxu0 0
    %1518 = vmatpush1.bf16.msra.mxu0 %v1504
    %1519 = vmatprep.subr.bf16.mxu0 0
    %1520 = vmatpush1.bf16.msra.mxu0 %v1505
    %1521 = vmatprep.subr.bf16.mxu0 0
    %1522 = vmatpush1.bf16.msra.mxu0 0
    %1523 = vmatprep.subr.bf16.mxu0 0
    %1524 = vmatpush1.bf16.msra.mxu0 0
    %1525 = vmatprep.subr.bf16.mxu0 0
    %1526 = vmatpush1.bf16.msra.mxu0 0
    %1527 = vmatprep.subr.bf16.mxu0 0
    %1528 = vmatpush1.bf16.msra.mxu0 0
    %1529 = vmatprep.subr.bf16.mxu0 0
    %1530 = vmatpush1.bf16.msra.mxu0 0
    %1531 = vmatprep.subr.bf16.mxu0 0
    %1532 = vmatpush1.bf16.msra.mxu0 0
    %1533 = vmatprep.subr.bf16.mxu0 0
    %1534 = vmatpush1.bf16.msra.mxu0 0
    %1535 = vmatprep.subr.bf16.mxu0 0
    %1536 = vmatpush1.bf16.msra.mxu0 0
    %1537 = vmatprep.subr.bf16.mxu0 0
    %1538 = vmatpush1.bf16.msra.mxu0 0
    %1539 = vmatprep.subr.bf16.mxu0 0
    %1540 = vmatpush1.bf16.msra.mxu0 0
    %1541 = vmatprep.subr.bf16.mxu0 0
    %1542 = vmatpush1.bf16.msra.mxu0 0
    %1543 = vmatprep.subr.bf16.mxu0 0
    %1544 = vmatpush1.bf16.msra.mxu0 0
    %1545 = vmatprep.mubr.bf16.mxu0 0
    %1546 = vmatmul.mubr.bf16.gmra.mrb[0].mxu0 %v1511
    %v1547 = vpop.f32.mrb[0].mxu0
    %v1548 = vadd.f32 %v1485, %v1547
    %v1549 = vpop.f32.mrb[0].mxu0
    %v1550 = vpop.f32.mrb[0].mxu0
    %v1551 = vadd.f32 %v1485, %v1550
    %v1552 = vpop.f32.mrb[0].mxu0
    %1553 = vdwg.mxu0
    %v1554 = vadd.f32 %v1384, %v1548
    %v1555 = vadd.f32 %v1385, %v1551
    %v1556 = vld [vmem:[#allocation8 + $0x10] sm:$0x1]
    %v1557 = vld [vmem:[#allocation8 + $0x11] sm:$0x1]
    %v1558 = vsel %vm263, %v1554, 0.0
    %1559 = vadd.xlane.f32.xlu0 %v1558
    %v1560 = vpop.xlane.xlu0 %1559
    %v1561 = vsel %vm263, %v1555, 0.0
    %1562 = vadd.xlane.f32.xlu0 %v1561
    %v1563 = vpop.xlane.xlu0 %1562
    %v1564 = vmul.f32 %v1560, %v270
    %v1565 = vmul.f32 %v1563, %v270
    %v1566 = vsub.f32 %v1554, %v1564
    %v1567 = vsub.f32 %v1555, %v1565
    %v1568 = vmul.f32 %v1566, %v1566
    %v1569 = vmul.f32 %v1567, %v1567
    %v1570 = vsel %vm263, %v1568, 0.0
    %1571 = vadd.xlane.f32.xlu0 %v1570
    %v1572 = vpop.xlane.xlu0 %1571
    %v1573 = vsel %vm263, %v1569, 0.0
    %1574 = vadd.xlane.f32.xlu0 %v1573
    %v1575 = vpop.xlane.xlu0 %1574
    %v1576 = vmul.f32 %v1572, %v270
    %v1577 = vmul.f32 %v1575, %v270
    %v1578 = vadd.f32 %v1576, 1e-12
    %v1579 = vadd.f32 %v1577, 1e-12
    %v1580 = vrsqrt.pop %v1578
    %v1581 = vrsqrt.pop %v1579
    %v1582 = vmul.f32 %v1566, %v1580
    %v1583 = vmul.f32 %v1567, %v1581
    %v1584 = vlaneseq
    %v1585 = vshrl.u32 %v1584, 7
    %v1586 = vsub.s32 0, %v1585
    %v1587 = vrot.slane %v1556, %v1586
    %v1588 = vmul.f32 %v1582, %v1587
    %v1589 = vmul.f32 %v1583, %v1587
    %v1590 = vlaneseq
    %v1591 = vshrl.u32 %v1590, 7
    %v1592 = vsub.s32 0, %v1591
    %v1593 = vrot.slane %v1557, %v1592
    %v1594 = vadd.f32 %v1588, %v1593
    %v1595 = vadd.f32 %v1589, %v1593
    %v1597 = vrot.slane %v1595, 7
    %vm1599 = vcmask 1040384
    %v1600 = vsel %vm1599, %v1594, %v1597
    %v1601 = vld [vmem:[#allocation7] sm:$0xf]
    %v1602 = vld [vmem:[#allocation7 + $0x4] sm:$0xf]
    %v1603 = vld [vmem:[#allocation7 + $0x8] sm:$0xf]
    %v1604 = vld [vmem:[#allocation7 + $0xc] sm:$0xf]
    %v1605 = vpack.c.bf16 %v1600, %v1600
    %v1606 = vld [vmem:[#allocation8 + $0x12] sm:$0x1]
    %v1607 = vlaneseq
    %v1608 = vshrl.u32 %v1607, 7
    %v1609 = vsub.s32 0, %v1608
    %v1610 = vrot.slane %v1606, %v1609
    %v1615 = vunpack.c.l.b16 %v1601
    %v1616 = vunpack.c.l.b16 %v1602
    %v1617 = vunpack.c.l.b16 %v1603
    %v1618 = vunpack.c.l.b16 %v1604
    %v1619 = vpack.c.b16 %v1616, %v1615
    %v1620 = vpack.c.b16 %v1618, %v1617
    %v1624 = vsel %vm263, %v1605, 0
    %1626 = vmatprep.subr.bf16.mxu0 0
    %1627 = vmatpush1.bf16.msra.mxu0 %v1619
    %1628 = vmatprep.subr.bf16.mxu0 0
    %1629 = vmatpush1.bf16.msra.mxu0 %v1620
    %1630 = vmatprep.subr.bf16.mxu0 0
    %1631 = vmatpush1.bf16.msra.mxu0 0
    %1632 = vmatprep.subr.bf16.mxu0 0
    %1633 = vmatpush1.bf16.msra.mxu0 0
    %1634 = vmatprep.subr.bf16.mxu0 0
    %1635 = vmatpush1.bf16.msra.mxu0 0
    %1636 = vmatprep.subr.bf16.mxu0 0
    %1637 = vmatpush1.bf16.msra.mxu0 0
    %1638 = vmatprep.subr.bf16.mxu0 0
    %1639 = vmatpush1.bf16.msra.mxu0 0
    %1640 = vmatprep.subr.bf16.mxu0 0
    %1641 = vmatpush1.bf16.msra.mxu0 0
    %1642 = vmatprep.subr.bf16.mxu0 0
    %1643 = vmatpush1.bf16.msra.mxu0 0
    %1644 = vmatprep.subr.bf16.mxu0 0
    %1645 = vmatpush1.bf16.msra.mxu0 0
    %1646 = vmatprep.subr.bf16.mxu0 0
    %1647 = vmatpush1.bf16.msra.mxu0 0
    %1648 = vmatprep.subr.bf16.mxu0 0
    %1649 = vmatpush1.bf16.msra.mxu0 0
    %1650 = vmatprep.subr.bf16.mxu0 0
    %1651 = vmatpush1.bf16.msra.mxu0 0
    %1652 = vmatprep.subr.bf16.mxu0 0
    %1653 = vmatpush1.bf16.msra.mxu0 0
    %1654 = vmatprep.subr.bf16.mxu0 0
    %1655 = vmatpush1.bf16.msra.mxu0 0
    %1656 = vmatprep.subr.bf16.mxu0 0
    %1657 = vmatpush1.bf16.msra.mxu0 0
    %1658 = vmatprep.mubr.bf16.mxu0 0
    %1659 = vmatmul.mubr.bf16.gmra.mrb[0].mxu0 %v1624
    %v1660 = vpop.f32.mrb[0].mxu0
    %v1661 = vadd.f32 %v1610, %v1660
    %v1662 = vpop.f32.mrb[0].mxu0
    %v1663 = vpop.f32.mrb[0].mxu0
    %v1664 = vpop.f32.mrb[0].mxu0
    %1665 = vdwg.mxu0
    %v1666 = vtanh.pop %v1661
    %v1667 = vpack.c.bf16 %v1666, %v1666
    %v1668 = vld [vmem:[#allocation8 + $0x13] sm:$0x1]
    %v1669 = vlaneseq
    %v1670 = vshrl.u32 %v1669, 7
    %v1671 = vsub.s32 0, %v1670
    %v1672 = vrot.slane %v1668, %v1671
    %1673 = vrot.lane.b32.xlu0 %v1619, 96
    %v1674 = vpop.permute.xlu0 %1673
    %1675 = vrot.lane.b32.xlu0 %v1620, 96
    %v1676 = vpop.permute.xlu0 %1675
    %v1680 = vsel %vm263, %v1667, 0
    %1682 = vmatprep.subr.bf16.mxu0 0
    %1683 = vmatpush1.bf16.msra.mxu0 %v1674
    %1684 = vmatprep.subr.bf16.mxu0 0
    %1685 = vmatpush1.bf16.msra.mxu0 %v1676
    %1686 = vmatprep.subr.bf16.mxu0 0
    %1687 = vmatpush1.bf16.msra.mxu0 0
    %1688 = vmatprep.subr.bf16.mxu0 0
    %1689 = vmatpush1.bf16.msra.mxu0 0
    %1690 = vmatprep.subr.bf16.mxu0 0
    %1691 = vmatpush1.bf16.msra.mxu0 0
    %1692 = vmatprep.subr.bf16.mxu0 0
    %1693 = vmatpush1.bf16.msra.mxu0 0
    %1694 = vmatprep.subr.bf16.mxu0 0
    %1695 = vmatpush1.bf16.msra.mxu0 0
    %1696 = vmatprep.subr.bf16.mxu0 0
    %1697 = vmatpush1.bf16.msra.mxu0 0
    %1698 = vmatprep.subr.bf16.mxu0 0
    %1699 = vmatpush1.bf16.msra.mxu0 0
    %1700 = vmatprep.subr.bf16.mxu0 0
    %1701 = vmatpush1.bf16.msra.mxu0 0
    %1702 = vmatprep.subr.bf16.mxu0 0
    %1703 = vmatpush1.bf16.msra.mxu0 0
    %1704 = vmatprep.subr.bf16.mxu0 0
    %1705 = vmatpush1.bf16.msra.mxu0 0
    %1706 = vmatprep.subr.bf16.mxu0 0
    %1707 = vmatpush1.bf16.msra.mxu0 0
    %1708 = vmatprep.subr.bf16.mxu0 0
    %1709 = vmatpush1.bf16.msra.mxu0 0
    %1710 = vmatprep.subr.bf16.mxu0 0
    %1711 = vmatpush1.bf16.msra.mxu0 0
    %1712 = vmatprep.subr.bf16.mxu0 0
    %1713 = vmatpush1.bf16.msra.mxu0 0
    %1714 = vmatprep.mubr.bf16.mxu0 0
    %1715 = vmatmul.mubr.bf16.gmra.mrb[0].mxu0 %v1680
    %v1716 = vpop.f32.mrb[0].mxu0
    %v1717 = vadd.f32 %v1672, %v1716
    %v1718 = vpop.f32.mrb[0].mxu0
    %v1719 = vpop.f32.mrb[0].mxu0
    %v1720 = vpop.f32.mrb[0].mxu0
    %1721 = vdwg.mxu0
    %vm1722 = vcmask 9216
    %v1723 = vsel %vm1722, %v1717, -inf
    %1724 = vmax.xlane.f32.xlu0 %v1723
    %v1725 = vpop.xlane.xlu0 %1724
    %v1726 = vsub.f32 %v1717, %v1725
    %v1727 = vmul.f32 %v1726, 1.442695
    %v1728 = vpow.pop %v1727
    %v1729 = vsel %vm1722, %v1728, 0.0
    %1730 = vadd.xlane.f32.xlu0 %v1729
    %v1731 = vpop.xlane.xlu0 %1730
    %v1732 = vlog2.pop %v1731
    %v1733 = vmul.f32 %v1732, 0.6931472
    %v1734 = vadd.f32 %v1733, %v1725
    %1735 = vset.pattern.permute.xlu0 3
    %1736 = vperm.xlu0 %1735, %v91
    %v1737 = vpop.permute.xlu0 %1736
    %vm1738 = vcmp.eq.s32.totalorder %v94, %v1737
    %v1739 = vsel %vm1738, 1, 0
    %v1740 = vcvt.s32.f32 %v1739
    %v1741 = vmul.f32 %v1717, %v1740
    %v1742 = vsel %vm1722, %v1741, 0.0
    %1743 = vadd.xlane.f32.xlu0 %v1742
    %v1744 = vpop.xlane.xlu0 %1743
    %v1745 = vsub.f32 %v1734, %v1744
    %vm1746 = vcmask 1041408
    %v1747 = vsel %vm1746, %v1745, 0.0
    %v1748 = vrot.slane %v1747, 4
    %v1749 = vadd.f32 %v1747, %v1748
    %v1750 = vrot.slane %v1749, 2
    %v1751 = vadd.f32 %v1749, %v1750
    %v1752 = vrot.slane %v1751, 1
    %v1753 = vadd.f32 %v1751, %v1752
    %v1754 = vmul.f32 %v1753, 0.5
    %vm1755 = vcmask 0
    %1756 = vst.msk [vmem:[#allocation10] sm:$0x1] %vm1755, %v1754
    %vm1757 = vcmp.eq.f32.partialorder %v1717, %v1725
    %v1758 = vsel %vm1757, %v94, 2
    %v1759 = vsel %vm1722, %v1758, 2147483647
    %v1760 = vand.u32 %v1759, 65535
    %v1761 = vshra.s32 %v1759, 16
    %v1762 = vcvt.s32.f32 %v1760
    %v1763 = vcvt.s32.f32 %v1761
    %1764 = vmin.xlane.f32.xlu0 %v1763
    %v1765 = vpop.xlane.xlu0 %1764
    %vm1766 = vcmp.eq.f32.partialorder %v1763, %v1765
    %v1767 = vsel %vm1766, %v1762, inf
    %1768 = vmin.xlane.f32.xlu0 %v1767
    %v1769 = vpop.xlane.xlu0 %1768
    %v1770 = vcvt.f32.s32 %v1769
    %v1771 = vcvt.f32.s32 %v1765
    %v1772 = vshll.u32 %v1771, 16
    %v1773 = vadd.s32 %v1772, %v1770
    %vm1774 = vcmask 1024
    %1775 = vst.msk [vmem:[%s10] sm:$0x3] %vm1774, %v1773
    // Predicated region
    $region54: #{_lambda_.1} parent=1 // pred_check
      _
    $region55: #{_lambda_.1} parent=1 // pred_check_branch
      %1777 = sbr.rel (0) target = $region57
    $region56: #{_lambda_.1} parent=1 // pred_region
      %s1779 = ssub.s32 16, 16
      %1780 = vsyncadd [#allocation4], %s1779
      %s1782 = sshll.u32 [#allocation10], 4
      %s1783 = int_to_ptr.vmem [resolvable:$true] %s1782
      %1785 = dma.vmem_to_hbm [thread:$0]  %s1783, 16, %s9, [#allocation4]
    $region57: #{_lambda_.1} parent=1 // pred_fallthru
      _
    // Predicated region
    $region58: #{_lambda_.1} parent=1 // pred_check
      _
    $region59: #{_lambda_.1} parent=1 // pred_check_branch
      %1787 = sbr.rel (0) target = $region61
    $region60: #{_lambda_.1} parent=1 // pred_region
      _
    $region61: #{_lambda_.1} parent=1 // pred_fallthru
      _
    // Predicated region
    $region62: #{_lambda_.1} parent=1 // pred_check
      _
    $region63: #{_lambda_.1} parent=1 // pred_check_branch
      %1789 = sbr.rel (0) target = $region65
    $region64: #{_lambda_.1} parent=1 // pred_region
      %1790 = dma.done [#allocation4], 16
    $region65: #{_lambda_.1} parent=1 // pred_fallthru
      _
    // Predicated region
    $region66: #{_lambda_.1} parent=1 // pred_check
      _
    $region67: #{_lambda_.1} parent=1 // pred_check_branch
      %1792 = sbr.rel (0) target = $region69
    $region68: #{_lambda_.1} parent=1 // pred_region
      _
    $region69: #{_lambda_.1} parent=1 // pred_fallthru
      _
    %1793 = vsyncpa [#allocation3], 1
    %1794 = vsyncpa [#allocation6], 1
    %1795 = vsyncpa [#allocation9], 1
    %1796 = vsyncpa [#allocation4], 1

</llo_original>
